<compile_context>
chip_gen: v7x
topology: tpu7x:2x2x1
jax: 0.10.0
libtpu: 0.0.40
codegen_flags: <defaults>
</compile_context>

<pallas_src>
import numpy as np
import jax
import jax.numpy as jnp
from jax.experimental import pallas as pl
from jax.experimental.pallas import tpu as pltpu


def make_forward_basis(filter_length, win_length=None, window="hann"):
    """Deterministic re-creation of STFT.__init__'s forward_basis buffer (numpy)."""
    if win_length is None:
        win_length = filter_length
    fourier_basis = np.fft.fft(np.eye(filter_length))
    cutoff = filter_length // 2 + 1
    fb = np.vstack(
        [np.real(fourier_basis[:cutoff, :]), np.imag(fourier_basis[:cutoff, :])]
    ).astype(np.float32)  # (2*cutoff, filter_length)
    if window is not None:
        assert filter_length >= win_length
        # scipy.signal.get_window('hann', N, fftbins=True): periodic Hann
        n = np.arange(win_length)
        win = (0.5 - 0.5 * np.cos(2.0 * np.pi * n / win_length)).astype(np.float32)
        lpad = (filter_length - win_length) // 2
        win = np.pad(win, (lpad, filter_length - win_length - lpad))
        fb = fb * win[None, :]
    return fb


def _round_up(a, m):
    return (a + m - 1) // m * m


def stft_forward(input_data, forward_basis, filter_length, hop_length, frame_tile=256):
    """Matches torch STFT.forward: input (B, S) -> (magnitude, phase), each (B, cutoff, T)."""
    B, S = input_data.shape
    K = int(filter_length)
    hop = int(hop_length)
    pad = K // 2
    cutoff = K // 2 + 1

    # TODO(synk): configurations with hop_length not dividing filter_length would need an
    # im2col fallback path; all practical STFT configs (2048/512, 16/4, ...) satisfy this.
    assert K % hop == 0, "this kernel requires hop_length to divide filter_length"
    r = K // hop  # number of hop-blocks per frame

    padded = jnp.pad(input_data.astype(jnp.float32), ((0, 0), (pad, pad)), mode="reflect")
    L = S + 2 * pad
    T = (L - K) // hop + 1

    TM = int(frame_tile)
    T_tiles = int(pl.cdiv(T, TM))
    T_pad = T_tiles * TM
    Nb_pad = (T_tiles + 1) * TM          # +1 block so the halo spec never indexes OOB
    Nb_filled = T + r - 1                # hop-blocks actually containing signal

    # hop-blocked signal (its natural size in HBM -- no im2col expansion), bf16.
    xb = padded[:, : Nb_filled * hop].reshape(B, Nb_filled, hop)
    xb = jnp.pad(xb, ((0, 0), (0, Nb_pad - Nb_filled), (0, 0))).astype(jnp.bfloat16)

    Cpad = _round_up(cutoff, 128)        # lane-aligned real/imag split
    K_pad = _round_up(K, 128)            # MXU-friendly contraction dim

    # Basis laid out as [real | zero-pad | imag | zero-pad], rows padded to K_pad.
    fbT = np.asarray(forward_basis, np.float32).T          # (K, 2*cutoff)
    basis_np = np.zeros((K_pad, 2 * Cpad), np.float32)
    basis_np[:K, :cutoff] = fbT[:, :cutoff]
    basis_np[:K, Cpad:Cpad + cutoff] = fbT[:, cutoff:]
    basis = jnp.asarray(basis_np, dtype=jnp.bfloat16)

    def kernel(cur_ref, nxt_ref, basis_ref, mag_ref, real_ref, imag_ref, frames_ref):
        # Zero the padded contraction columns (no-op at real sizes where K == K_pad).
        if K_pad > K:
            frames_ref[:, K:] = jnp.zeros((TM, K_pad - K), frames_ref.dtype)
        # In-VMEM im2col: frame t of this tile is window rows [t, t+r), where the
        # window is the current TM hop-blocks plus the first r-1 blocks of the next tile.
        for j in range(r):
            cols = slice(j * hop, (j + 1) * hop)
            frames_ref[: TM - j, cols] = cur_ref[0, j:, :]
            if j > 0:
                frames_ref[TM - j:, cols] = nxt_ref[0, :j, :]
        # Single bf16 MXU matmul with f32 accumulation.
        ft = jnp.dot(frames_ref[...], basis_ref[...], preferred_element_type=jnp.float32)
        real = ft[:, :Cpad]      # lane-aligned slices
        imag = ft[:, Cpad:]
        mag_ref[0] = jnp.sqrt(real * real + imag * imag)
        real_ref[0] = real.astype(real_ref.dtype)
        imag_ref[0] = imag.astype(imag_ref.dtype)

    sig_spec = pl.BlockSpec((1, TM, hop), lambda b, i: (b, i, 0))
    halo_spec = pl.BlockSpec((1, TM, hop), lambda b, i: (b, i + 1, 0))
    basis_spec = pl.BlockSpec((K_pad, 2 * Cpad), lambda b, i: (0, 0))   # resident
    out_spec = pl.BlockSpec((1, TM, Cpad), lambda b, i: (b, i, 0))

    flops = 2 * B * T_pad * K_pad * (2 * Cpad)
    bytes_accessed = (2 * xb.size * 2 + basis.size * 2
                      + B * T_pad * Cpad * (4 + 2 + 2))

    mag, real, imag = pl.pallas_call(
        kernel,
        grid=(B, T_tiles),
        in_specs=[sig_spec, halo_spec, basis_spec],
        out_specs=(out_spec, out_spec, out_spec),
        out_shape=(
            jax.ShapeDtypeStruct((B, T_pad, Cpad), jnp.float32),
            jax.ShapeDtypeStruct((B, T_pad, Cpad), jnp.bfloat16),
            jax.ShapeDtypeStruct((B, T_pad, Cpad), jnp.bfloat16),
        ),
        scratch_shapes=[pltpu.VMEM((TM, K_pad), jnp.bfloat16)],
        compiler_params=pltpu.CompilerParams(
            dimension_semantics=("parallel", "parallel"),
            vmem_limit_bytes=48 * 1024 * 1024,
        ),
        cost_estimate=pl.CostEstimate(
            flops=flops, transcendentals=0, bytes_accessed=bytes_accessed),
    )(xb, xb, basis)

    magnitude = mag[:, :T, :cutoff].transpose(0, 2, 1)
    # TODO(synk): phase (atan2) is computed outside the kernel (Mosaic atan2 lowering is not
    # relied upon); real/imag are emitted as bf16 to halve that HBM round-trip.
    phase = jnp.arctan2(
        imag[:, :T, :cutoff].astype(jnp.float32),
        real[:, :T, :cutoff].astype(jnp.float32),
    ).transpose(0, 2, 1)
    return magnitude, phase


def _reference(x, fb, filter_length, hop_length):
    """bf16-consistent reference (same operand rounding as the kernel's MXU path)."""
    B, S = x.shape
    pad = filter_length // 2
    cutoff = filter_length // 2 + 1
    padded = jnp.pad(x.astype(jnp.float32), ((0, 0), (pad, pad)), mode="reflect")
    T = (S + 2 * pad - filter_length) // hop_length + 1
    starts = jnp.arange(T) * hop_length
    idx = starts[:, None] + jnp.arange(filter_length)[None, :]
    frames = padded[:, idx].astype(jnp.bfloat16).astype(jnp.float32)      # (B, T, K)
    fbT = jnp.asarray(fb.T, jnp.float32).astype(jnp.bfloat16).astype(jnp.float32)
    ft = jnp.einsum("btk,kc->btc", frames, fbT, precision=jax.lax.Precision.HIGHEST)
    re, im = ft[..., :cutoff], ft[..., cutoff:]
    ref_mag = jnp.sqrt(re * re + im * im).transpose(0, 2, 1)
    re_b = re.astype(jnp.bfloat16).astype(jnp.float32)
    im_b = im.astype(jnp.bfloat16).astype(jnp.float32)
    ref_phase = jnp.arctan2(im_b, re_b).transpose(0, 2, 1)
    return ref_mag, ref_phase


if __name__ == "__main__":
    filter_length = 16
    hop_length = 4
    B, S = 2, 64

    key = jax.random.PRNGKey(0)
    x = jax.random.normal(key, (B, S), dtype=jnp.float32)

    fb = make_forward_basis(filter_length)  # deterministic "parameter" (buffer)
    ref_mag, ref_phase = _reference(x, fb, filter_length, hop_length)

    pad = filter_length // 2
    cutoff = filter_length // 2 + 1
    T = (S + 2 * pad - filter_length) // hop_length + 1

    # Run twice: default tiling (single tile) and a small tile that exercises the
    # multi-tile + halo path.
    for tile in (256, 8):
        magnitude, phase = stft_forward(x, fb, filter_length, hop_length, frame_tile=tile)
        jax.block_until_ready((magnitude, phase))

        assert magnitude.shape == (B, cutoff, T), magnitude.shape
        assert phase.shape == (B, cutoff, T), phase.shape
        assert jnp.allclose(magnitude, ref_mag, atol=2e-3, rtol=2e-3), (
            f"magnitude mismatch (tile={tile})")
        # phase: compare only well-conditioned bins, modulo 2*pi wrap-around
        diff = jnp.abs(phase - ref_phase)
        diff = jnp.minimum(diff, 2.0 * jnp.pi - diff)
        diff = jnp.where(ref_mag > 1e-2, diff, 0.0)
        assert float(jnp.max(diff)) < 2e-2, f"phase mismatch (tile={tile})"

    print("KERNEL_OK")
</pallas_src>

<mosaic_0001>
module attributes {stable_mosaic.version = 11 : i64} {
  func.func @kernel(%arg0: i32, %arg1: i32, %arg2: memref<1x256x4xbf16, #tpu.memory_space<vmem>>, %arg3: memref<1x256x4xbf16, #tpu.memory_space<vmem>>, %arg4: memref<128x256xbf16, #tpu.memory_space<vmem>>, %arg5: memref<1x256x128xf32, #tpu.memory_space<vmem>>, %arg6: memref<1x256x128xbf16, #tpu.memory_space<vmem>>, %arg7: memref<1x256x128xbf16, #tpu.memory_space<vmem>>, %arg8: memref<256x128xbf16, #tpu.memory_space<vmem>>) attributes {dimension_semantics = [#tpu.dimension_semantics<parallel>, #tpu.dimension_semantics<parallel>], iteration_bounds = array<i64: 2, 1>, scalar_prefetch = 0 : i64, scratch_operands = 1 : i64, tpu.core_type = #tpu.core_type<tc>, window_params = [{transform_indices = @transform_0, window_bounds = array<i64: 1, 256, 4>}, {transform_indices = @transform_1, window_bounds = array<i64: 1, 256, 4>}, {pipeline_mode = #tpu.pipeline_mode<synchronous>, transform_indices = @transform_2, window_bounds = array<i64: 128, 256>}, {transform_indices = @transform_3, window_bounds = array<i64: 1, 256, 128>}, {transform_indices = @transform_4, window_bounds = array<i64: 1, 256, 128>}, {transform_indices = @transform_5, window_bounds = array<i64: 1, 256, 128>}]} {
    %cst = arith.constant 0.000000e+00 : bf16
    %0 = vector.broadcast %cst : bf16 to vector<256x112xbf16>
    %c0 = arith.constant 0 : index
    %c16 = arith.constant 16 : index
    %1 = vector.load %arg8[%c0, %c16] : memref<256x128xbf16, #tpu.memory_space<vmem>>, vector<256x112xbf16>
    tpu.vector_store %arg8[%c0, %c16], %0 {strides = array<i32>} : memref<256x128xbf16, #tpu.memory_space<vmem>>, vector<256x112xbf16>,
    %c0_0 = arith.constant 0 : index
    %c0_1 = arith.constant 0 : index
    %c0_2 = arith.constant 0 : index
    %2 = vector.load %arg2[%c0_0, %c0_1, %c0_2] : memref<1x256x4xbf16, #tpu.memory_space<vmem>>, vector<1x256x4xbf16>
    %3 = vector.shape_cast %2 : vector<1x256x4xbf16> to vector<256x4xbf16>
    %c0_3 = arith.constant 0 : index
    %c0_4 = arith.constant 0 : index
    %4 = vector.load %arg8[%c0_3, %c0_4] : memref<256x128xbf16, #tpu.memory_space<vmem>>, vector<256x4xbf16>
    tpu.vector_store %arg8[%c0_3, %c0_4], %3 {strides = array<i32>} : memref<256x128xbf16, #tpu.memory_space<vmem>>, vector<256x4xbf16>,
    %c0_5 = arith.constant 0 : index
    %c1 = arith.constant 1 : index
    %c0_6 = arith.constant 0 : index
    %5 = vector.load %arg2[%c0_5, %c1, %c0_6] : memref<1x256x4xbf16, #tpu.memory_space<vmem>>, vector<1x255x4xbf16>
    %6 = vector.shape_cast %5 : vector<1x255x4xbf16> to vector<255x4xbf16>
    %c0_7 = arith.constant 0 : index
    %c4 = arith.constant 4 : index
    %7 = vector.load %arg8[%c0_7, %c4] : memref<256x128xbf16, #tpu.memory_space<vmem>>, vector<255x4xbf16>
    tpu.vector_store %arg8[%c0_7, %c4], %6 {strides = array<i32>} : memref<256x128xbf16, #tpu.memory_space<vmem>>, vector<255x4xbf16>,
    %c0_8 = arith.constant 0 : index
    %c0_9 = arith.constant 0 : index
    %c0_10 = arith.constant 0 : index
    %8 = vector.load %arg3[%c0_8, %c0_9, %c0_10] : memref<1x256x4xbf16, #tpu.memory_space<vmem>>, vector<1x1x4xbf16>
    %9 = vector.shape_cast %8 : vector<1x1x4xbf16> to vector<1x4xbf16>
    %c255 = arith.constant 255 : index
    %c4_11 = arith.constant 4 : index
    %10 = vector.load %arg8[%c255, %c4_11] : memref<256x128xbf16, #tpu.memory_space<vmem>>, vector<1x4xbf16>
    tpu.vector_store %arg8[%c255, %c4_11], %9 {strides = array<i32>} : memref<256x128xbf16, #tpu.memory_space<vmem>>, vector<1x4xbf16>,
    %c0_12 = arith.constant 0 : index
    %c2 = arith.constant 2 : index
    %c0_13 = arith.constant 0 : index
    %11 = vector.load %arg2[%c0_12, %c2, %c0_13] : memref<1x256x4xbf16, #tpu.memory_space<vmem>>, vector<1x254x4xbf16>
    %12 = vector.shape_cast %11 : vector<1x254x4xbf16> to vector<254x4xbf16>
    %c0_14 = arith.constant 0 : index
    %c8 = arith.constant 8 : index
    %13 = vector.load %arg8[%c0_14, %c8] : memref<256x128xbf16, #tpu.memory_space<vmem>>, vector<254x4xbf16>
    tpu.vector_store %arg8[%c0_14, %c8], %12 {strides = array<i32>} : memref<256x128xbf16, #tpu.memory_space<vmem>>, vector<254x4xbf16>,
    %c0_15 = arith.constant 0 : index
    %c0_16 = arith.constant 0 : index
    %c0_17 = arith.constant 0 : index
    %14 = vector.load %arg3[%c0_15, %c0_16, %c0_17] : memref<1x256x4xbf16, #tpu.memory_space<vmem>>, vector<1x2x4xbf16>
    %15 = vector.shape_cast %14 : vector<1x2x4xbf16> to vector<2x4xbf16>
    %c254 = arith.constant 254 : index
    %c8_18 = arith.constant 8 : index
    %16 = vector.load %arg8[%c254, %c8_18] : memref<256x128xbf16, #tpu.memory_space<vmem>>, vector<2x4xbf16>
    tpu.vector_store %arg8[%c254, %c8_18], %15 {strides = array<i32>} : memref<256x128xbf16, #tpu.memory_space<vmem>>, vector<2x4xbf16>,
    %c0_19 = arith.constant 0 : index
    %c3 = arith.constant 3 : index
    %c0_20 = arith.constant 0 : index
    %17 = vector.load %arg2[%c0_19, %c3, %c0_20] : memref<1x256x4xbf16, #tpu.memory_space<vmem>>, vector<1x253x4xbf16>
    %18 = vector.shape_cast %17 : vector<1x253x4xbf16> to vector<253x4xbf16>
    %c0_21 = arith.constant 0 : index
    %c12 = arith.constant 12 : index
    %19 = vector.load %arg8[%c0_21, %c12] : memref<256x128xbf16, #tpu.memory_space<vmem>>, vector<253x4xbf16>
    tpu.vector_store %arg8[%c0_21, %c12], %18 {strides = array<i32>} : memref<256x128xbf16, #tpu.memory_space<vmem>>, vector<253x4xbf16>,
    %c0_22 = arith.constant 0 : index
    %c0_23 = arith.constant 0 : index
    %c0_24 = arith.constant 0 : index
    %20 = vector.load %arg3[%c0_22, %c0_23, %c0_24] : memref<1x256x4xbf16, #tpu.memory_space<vmem>>, vector<1x3x4xbf16>
    %21 = vector.shape_cast %20 : vector<1x3x4xbf16> to vector<3x4xbf16>
    %c253 = arith.constant 253 : index
    %c12_25 = arith.constant 12 : index
    %22 = vector.load %arg8[%c253, %c12_25] : memref<256x128xbf16, #tpu.memory_space<vmem>>, vector<3x4xbf16>
    tpu.vector_store %arg8[%c253, %c12_25], %21 {strides = array<i32>} : memref<256x128xbf16, #tpu.memory_space<vmem>>, vector<3x4xbf16>,
    %c0_26 = arith.constant 0 : index
    %c0_27 = arith.constant 0 : index
    %23 = vector.load %arg8[%c0_26, %c0_27] : memref<256x128xbf16, #tpu.memory_space<vmem>>, vector<256x128xbf16>
    %c0_28 = arith.constant 0 : index
    %c0_29 = arith.constant 0 : index
    %24 = vector.load %arg4[%c0_28, %c0_29] : memref<128x256xbf16, #tpu.memory_space<vmem>>, vector<128x256xbf16>
    %cst_30 = arith.constant dense<0.000000e+00> : vector<256x256xf32>
    %25 = tpu.matmul %23, %24, %cst_30 {dimension_numbers = #tpu.dot_dimension_numbers<[1], [0], [0], [1], [0, 0, 1, 1], [], []>} : vector<256x128xbf16>, vector<128x256xbf16>, vector<256x256xf32> -> vector<256x256xf32>
    %26 = vector.extract_strided_slice %25 {offsets = [0, 0], sizes = [256, 128], strides = [1, 1]} : vector<256x256xf32> to vector<256x128xf32>
    %27 = vector.extract_strided_slice %25 {offsets = [0, 128], sizes = [256, 128], strides = [1, 1]} : vector<256x256xf32> to vector<256x128xf32>
    %28 = arith.mulf %26, %26 : vector<256x128xf32>
    %29 = arith.mulf %27, %27 : vector<256x128xf32>
    %30 = arith.addf %28, %29 : vector<256x128xf32>
    %31 = math.sqrt %30 : vector<256x128xf32>
    %c0_31 = arith.constant 0 : index
    %c0_32 = arith.constant 0 : index
    %c0_33 = arith.constant 0 : index
    %32 = vector.load %arg5[%c0_31, %c0_32, %c0_33] : memref<1x256x128xf32, #tpu.memory_space<vmem>>, vector<1x256x128xf32>
    %33 = vector.shape_cast %32 : vector<1x256x128xf32> to vector<256x128xf32>
    %34 = vector.shape_cast %31 : vector<256x128xf32> to vector<1x256x128xf32>
    tpu.vector_store %arg5[%c0_31, %c0_32, %c0_33], %34 {strides = array<i32>} : memref<1x256x128xf32, #tpu.memory_space<vmem>>, vector<1x256x128xf32>,
    %35 = arith.truncf %26 : vector<256x128xf32> to vector<256x128xbf16>
    %c0_34 = arith.constant 0 : index
    %c0_35 = arith.constant 0 : index
    %c0_36 = arith.constant 0 : index
    %36 = vector.load %arg6[%c0_34, %c0_35, %c0_36] : memref<1x256x128xbf16, #tpu.memory_space<vmem>>, vector<1x256x128xbf16>
    %37 = vector.shape_cast %36 : vector<1x256x128xbf16> to vector<256x128xbf16>
    %38 = vector.shape_cast %35 : vector<256x128xbf16> to vector<1x256x128xbf16>
    tpu.vector_store %arg6[%c0_34, %c0_35, %c0_36], %38 {strides = array<i32>} : memref<1x256x128xbf16, #tpu.memory_space<vmem>>, vector<1x256x128xbf16>,
    %39 = arith.truncf %27 : vector<256x128xf32> to vector<256x128xbf16>
    %c0_37 = arith.constant 0 : index
    %c0_38 = arith.constant 0 : index
    %c0_39 = arith.constant 0 : index
    %40 = vector.load %arg7[%c0_37, %c0_38, %c0_39] : memref<1x256x128xbf16, #tpu.memory_space<vmem>>, vector<1x256x128xbf16>
    %41 = vector.shape_cast %40 : vector<1x256x128xbf16> to vector<256x128xbf16>
    %42 = vector.shape_cast %39 : vector<256x128xbf16> to vector<1x256x128xbf16>
    tpu.vector_store %arg7[%c0_37, %c0_38, %c0_39], %42 {strides = array<i32>} : memref<1x256x128xbf16, #tpu.memory_space<vmem>>, vector<1x256x128xbf16>,
    return
  }
  func.func @transform_0(%arg0: i32, %arg1: i32) -> (i32, i32, i32) {
    %c0_i32 = arith.constant 0 : i32
    %c0_i32_0 = arith.constant 0 : i32
    return %arg0, %arg1, %c0_i32 : i32, i32, i32
  }
  func.func @transform_1(%arg0: i32, %arg1: i32) -> (i32, i32, i32) {
    %c1_i32 = arith.constant 1 : i32
    %0 = arith.addi %arg1, %c1_i32 : i32
    %c0_i32 = arith.constant 0 : i32
    %c0_i32_0 = arith.constant 0 : i32
    return %arg0, %0, %c0_i32 : i32, i32, i32
  }
  func.func @transform_2(%arg0: i32, %arg1: i32) -> (i32, i32) {
    %c0_i32 = arith.constant 0 : i32
    %c0_i32_0 = arith.constant 0 : i32
    %c0_i32_1 = arith.constant 0 : i32
    return %c0_i32, %c0_i32_0 : i32, i32
  }
  func.func @transform_3(%arg0: i32, %arg1: i32) -> (i32, i32, i32) {
    %c0_i32 = arith.constant 0 : i32
    %c0_i32_0 = arith.constant 0 : i32
    return %arg0, %arg1, %c0_i32 : i32, i32, i32
  }
  func.func @transform_4(%arg0: i32, %arg1: i32) -> (i32, i32, i32) {
    %c0_i32 = arith.constant 0 : i32
    %c0_i32_0 = arith.constant 0 : i32
    return %arg0, %arg1, %c0_i32 : i32, i32, i32
  }
  func.func @transform_5(%arg0: i32, %arg1: i32) -> (i32, i32, i32) {
    %c0_i32 = arith.constant 0 : i32
    %c0_i32_0 = arith.constant 0 : i32
    return %arg0, %arg1, %c0_i32 : i32, i32, i32
  }
}

</mosaic_0001>

<llo_original>
// kernel: tpu_custom_call.1
$region0: #{tpu_custom_call.1}
  #allocation0 [shape = 'u32[]', space=smem, size = 0x4, offset = 0x4, fixed_abs, tag = 'smem constant byte address 0x4 - core index']
  #allocation1 [shape = 'u32[144,128]{1,0:T(1,128)}', space=vmem, size = 0x12000, scoped, tag = 'internal scratch']
  #allocation2 [shape = 'bf16[256,128]{1,0:T(16,128)(2,1)}', space=vmem, size = 0x10000, scoped, tag = 'scratch operand']
  %s0 = inlined_call_operand.vmem [shape: bf16[2,512,4], index: 0, kind: input, shape index: {}]
  %s1 = inlined_call_operand.vmem [shape: bf16[2,512,4], index: 1, kind: input, shape index: {}]
  %s2 = inlined_call_operand.vmem [shape: bf16[128,256], index: 2, kind: input, shape index: {}]
  %s3 = inlined_call_operand.hbm [shape: f32[2,256,128], index: 3, kind: output, shape index: {0}]
  %s4 = inlined_call_operand.hbm [shape: bf16[2,256,128], index: 4, kind: output, shape index: {1}]
  %s5 = inlined_call_operand.hbm [shape: bf16[2,256,128], index: 5, kind: output, shape index: {2}]
  %6 = xla_tuple %s3, %s4, %s5
  %s7 = sld [smem:[#allocation0]]
  $region61: #{tpu_custom_call.1} parent=0
    _
  %s9 = ssub.s32 1, %s7
  %s10 = scalar_select 0, %s9, %s7
  $region1: #{tpu_custom_call.1} parent=0
    #allocation3 [shape = 'u8[262144]{0}', space=vmem, size = 0x40000, scoped, tag = 'output window, operand 0']
    #allocation4 [shape = 's32[2]{0}', space=sflag, size = 0x8, scoped, tag = 'scoped memory for tpu_custom_call.1']
    #allocation5 [shape = 'u8[131072]{0}', space=vmem, size = 0x20000, scoped, tag = 'output window, operand 1']
    #allocation6 [shape = 's32[2]{0}', space=sflag, size = 0x8, scoped, tag = 'scoped memory for tpu_custom_call.1']
    #allocation7 [shape = 'u8[131072]{0}', space=vmem, size = 0x20000, scoped, tag = 'output window, operand 2']
    %11 = vsyncpa [#allocation4], 0
    %s12 = scalar_lea.sflag [#allocation4], 1
    %13 = vsyncpa %s12, 0
    %14 = vsyncpa [#allocation6], 0
    %s15 = scalar_lea.sflag [#allocation6], 1
    %16 = vsyncpa %s15, 0
    loop: start=0, step=1, limit=4
    $region2: #{tpu_custom_call.1} parent=1 // loop_pre_header
      _
    $region3: #{tpu_custom_call.1} parent=1 // loop_header
      %s18 = sphi 0, %s22
      %p19 = scmp.ge.s32.totalorder %s18, 4
      %s25 = sphi 0, %s37
      %s26 = sphi 0, %s33
      %s27 = sphi 0, %s25
      %s28 = sphi 0, %s26
      %s29 = sphi 0, %s27
      %s30 = sphi 0, %s28
      %s42 = sphi 0, %s44
      %s45 = sphi 0, %s42
      %s46 = sphi 0, %s45
      %s62 = sphi 0, %s46
      %s72 = sphi 0, %s74
      %s75 = sphi 0, %s72
      %s76 = sphi 0, %s75
      %s92 = sphi 0, %s76
      %s96 = sphi 0, %s96
      %s98 = sphi 0, %s96
      %s99 = sphi 0, %s98
      %s113 = sphi 0, %s99
      %s121 = sphi 0, %s123
      %s124 = sphi 0, %s121
      %s125 = sphi 0, %s124
      %s141 = sphi 0, %s125
      %s149 = sphi 0, %s151
      %s152 = sphi 0, %s149
      %s153 = sphi 0, %s152
      %s169 = sphi 0, %s153
      %s177 = sphi 0, %s179
      %s180 = sphi 0, %s177
      %s181 = sphi 0, %s180
      %s197 = sphi 0, %s181
    $region4: #{tpu_custom_call.1} parent=1 // loop_header_branch
      %21 = sbr.rel (%p19) target = $region8
    $region5: #{tpu_custom_call.1} parent=1 // loop_body
      %s23 = ssub.s32 %s18, 1
      %s24 = ssub.s32 %s18, 2
      %s31 = sadd.s32 1, %s26
      %p32 = scmp.ge.s32.totalorder %s31, 1
      %s33 = scalar_select %p32, 0, %s31
      %s34 = sadd.s32 1, %s25
      %s35 = scalar_select %p32, %s34, %s25
      %p36 = scmp.ge.s32.totalorder %s35, 2
      %s37 = scalar_select %p36, 0, %s35
      %s38 = ssub.s32 %s25, %s37
      %s39 = ssub.s32 %s26, %s33
      %s40 = sor.u32 %s38, %s39
      %p41 = scmp.eq.s32.totalorder %s40, 0
      %s43 = sadd.s32 %s42, 1
      %s44 = scalar_select %p41, %s42, %s43
      %p47 = pneg %p41
      %p48 = scmp.eq.s32.totalorder %s18, 1
      %p49 = por %p47, %p48
      %p50 = scmp.ne.s32.totalorder %s42, %s45
      %p51 = scmp.eq.s32.totalorder %s18, 0
      %p52 = por %p50, %p51
      %p53 = scmp.ne.s32.totalorder %s42, %s45
      %p54 = scmp.eq.s32.totalorder %s23, 1
      %p55 = por %p53, %p54
      %p56 = scmp.ne.s32.totalorder %s45, %s46
      %p57 = scmp.eq.s32.totalorder %s23, 0
      %p58 = por %p56, %p57
      %p59 = scmp.ne.s32.totalorder %s45, %s46
      %p60 = scmp.eq.s32.totalorder %s24, 1
      %p61 = por %p59, %p60
      %p63 = scmp.ne.s32.totalorder %s46, %s62
      %p64 = scmp.eq.s32.totalorder %s24, 0
      %p65 = por %p63, %p64
      %s66 = sadd.s32 %s26, 1
      %s67 = sadd.s32 %s33, 1
      %s68 = ssub.s32 %s25, %s37
      %s69 = ssub.s32 %s66, %s67
      %s70 = sor.u32 %s68, %s69
      %p71 = scmp.eq.s32.totalorder %s70, 0
      %s73 = sadd.s32 %s72, 1
      %s74 = scalar_select %p71, %s72, %s73
      %p77 = pneg %p71
      %p78 = scmp.eq.s32.totalorder %s18, 1
      %p79 = por %p77, %p78
      %p80 = scmp.ne.s32.totalorder %s72, %s75
      %p81 = scmp.eq.s32.totalorder %s18, 0
      %p82 = por %p80, %p81
      %p83 = scmp.ne.s32.totalorder %s72, %s75
      %p84 = scmp.eq.s32.totalorder %s23, 1
      %p85 = por %p83, %p84
      %p86 = scmp.ne.s32.totalorder %s75, %s76
      %p87 = scmp.eq.s32.totalorder %s23, 0
      %p88 = por %p86, %p87
      %p89 = scmp.ne.s32.totalorder %s75, %s76
      %p90 = scmp.eq.s32.totalorder %s24, 1
      %p91 = por %p89, %p90
      %p93 = scmp.ne.s32.totalorder %s76, %s92
      %p94 = scmp.eq.s32.totalorder %s24, 0
      %p95 = por %p93, %p94
      %s97 = sadd.s32 %s96, 1
      %p100 = scmp.eq.s32.totalorder %s18, 1
      %p101 = scmp.ne.s32.totalorder %s96, %s98
      %p102 = scmp.eq.s32.totalorder %s18, 0
      %p103 = por %p101, %p102
      %p104 = scmp.ne.s32.totalorder %s96, %s98
      %p105 = scmp.eq.s32.totalorder %s23, 1
      %p106 = por %p104, %p105
      %p107 = scmp.ne.s32.totalorder %s98, %s99
      %p108 = scmp.eq.s32.totalorder %s23, 0
      %p109 = por %p107, %p108
      %p110 = scmp.ne.s32.totalorder %s98, %s99
      %p111 = scmp.eq.s32.totalorder %s24, 1
      %p112 = por %p110, %p111
      %p114 = scmp.ne.s32.totalorder %s99, %s113
      %p115 = scmp.eq.s32.totalorder %s24, 0
      %p116 = por %p114, %p115
      %s117 = ssub.s32 %s25, %s37
      %s118 = ssub.s32 %s26, %s33
      %s119 = sor.u32 %s117, %s118
      %p120 = scmp.eq.s32.totalorder %s119, 0
      %s122 = sadd.s32 %s121, 1
      %s123 = scalar_select %p120, %s121, %s122
      %p126 = pneg %p120
      %p127 = scmp.eq.s32.totalorder %s18, 1
      %p128 = por %p126, %p127
      %p129 = scmp.ne.s32.totalorder %s121, %s124
      %p130 = scmp.eq.s32.totalorder %s18, 0
      %p131 = por %p129, %p130
      %p132 = scmp.ne.s32.totalorder %s121, %s124
      %p133 = scmp.eq.s32.totalorder %s23, 1
      %p134 = por %p132, %p133
      %p135 = scmp.ne.s32.totalorder %s124, %s125
      %p136 = scmp.eq.s32.totalorder %s23, 0
      %p137 = por %p135, %p136
      %p138 = scmp.ne.s32.totalorder %s124, %s125
      %p139 = scmp.eq.s32.totalorder %s24, 1
      %p140 = por %p138, %p139
      %p142 = scmp.ne.s32.totalorder %s125, %s141
      %p143 = scmp.eq.s32.totalorder %s24, 0
      %p144 = por %p142, %p143
      %s145 = ssub.s32 %s25, %s37
      %s146 = ssub.s32 %s26, %s33
      %s147 = sor.u32 %s145, %s146
      %p148 = scmp.eq.s32.totalorder %s147, 0
      %s150 = sadd.s32 %s149, 1
      %s151 = scalar_select %p148, %s149, %s150
      %p154 = pneg %p148
      %p155 = scmp.eq.s32.totalorder %s18, 1
      %p156 = por %p154, %p155
      %p157 = scmp.ne.s32.totalorder %s149, %s152
      %p158 = scmp.eq.s32.totalorder %s18, 0
      %p159 = por %p157, %p158
      %p160 = scmp.ne.s32.totalorder %s149, %s152
      %p161 = scmp.eq.s32.totalorder %s23, 1
      %p162 = por %p160, %p161
      %p163 = scmp.ne.s32.totalorder %s152, %s153
      %p164 = scmp.eq.s32.totalorder %s23, 0
      %p165 = por %p163, %p164
      %p166 = scmp.ne.s32.totalorder %s152, %s153
      %p167 = scmp.eq.s32.totalorder %s24, 1
      %p168 = por %p166, %p167
      %p170 = scmp.ne.s32.totalorder %s153, %s169
      %p171 = scmp.eq.s32.totalorder %s24, 0
      %p172 = por %p170, %p171
      %s173 = ssub.s32 %s25, %s37
      %s174 = ssub.s32 %s26, %s33
      %s175 = sor.u32 %s173, %s174
      %p176 = scmp.eq.s32.totalorder %s175, 0
      %s178 = sadd.s32 %s177, 1
      %s179 = scalar_select %p176, %s177, %s178
      %p182 = pneg %p176
      %p183 = scmp.eq.s32.totalorder %s18, 1
      %p184 = por %p182, %p183
      %p185 = scmp.ne.s32.totalorder %s177, %s180
      %p186 = scmp.eq.s32.totalorder %s18, 0
      %p187 = por %p185, %p186
      %p188 = scmp.ne.s32.totalorder %s177, %s180
      %p189 = scmp.eq.s32.totalorder %s23, 1
      %p190 = por %p188, %p189
      %p191 = scmp.ne.s32.totalorder %s180, %s181
      %p192 = scmp.eq.s32.totalorder %s23, 0
      %p193 = por %p191, %p192
      %p194 = scmp.ne.s32.totalorder %s180, %s181
      %p195 = scmp.eq.s32.totalorder %s24, 1
      %p196 = por %p194, %p195
      %p198 = scmp.ne.s32.totalorder %s181, %s197
      %p199 = scmp.eq.s32.totalorder %s24, 0
      %p200 = por %p198, %p199
      %p201 = scmp.le.s32.totalorder 1, %s18
      %p202 = scmp.lt.s32.totalorder %s18, 3
      %p203 = pnand %p201, %p202
      %p204 = pneg %p203
      // Predicated region
      $region9: #{tpu_custom_call.1} parent=5 // pred_check
        _
      $region10: #{tpu_custom_call.1} parent=5 // pred_check_branch
        %206 = sbr.rel (%p203) target = $region12
      $region11: #{tpu_custom_call.1} parent=5 // pred_region
        %s207 = ssub.s32 %s18, 1
        // Predicated region
        $region13: #{tpu_custom_call.1} parent=11 // pred_check
          %p208 = pneg %p109
        $region14: #{tpu_custom_call.1} parent=11 // pred_check_branch
          %210 = sbr.rel (%p208) target = $region16
        $region15: #{tpu_custom_call.1} parent=11 // pred_region
          _
        $region16: #{tpu_custom_call.1} parent=11 // pred_fallthru
          _
      $region12: #{tpu_custom_call.1} parent=5 // pred_fallthru
        _
      %p211 = scmp.lt.s32.totalorder %s18, 2
      // Predicated region
      $region17: #{tpu_custom_call.1} parent=5 // pred_check
        %p212 = pneg %p211
      $region18: #{tpu_custom_call.1} parent=5 // pred_check_branch
        %214 = sbr.rel (%p212) target = $region20
      $region19: #{tpu_custom_call.1} parent=5 // pred_region
        // Predicated region
        $region21: #{tpu_custom_call.1} parent=19 // pred_check
          %p215 = pneg %p52
        $region22: #{tpu_custom_call.1} parent=19 // pred_check_branch
          %217 = sbr.rel (%p215) target = $region24
        $region23: #{tpu_custom_call.1} parent=19 // pred_region
          %s218 = smul.u32 32, %s26
          %p219 = scmp.lt.s32.totalorder %s25, 1
          %s220 = scalar_select %p219, %s25, 1
          %p221 = scmp.lt.s32.totalorder %s218, 63
          %s222 = scalar_select %p221, %s218, 63
          %s223 = smul.addr %s220, 64
          %s224 = sadd.s32 %s222, %s223
          %s225 = smul.addr %s224, 4
          %s226 = scalar_lea.vmem %s0, %s225
          %s227 = smul.u32 32, %s26
        $region24: #{tpu_custom_call.1} parent=19 // pred_fallthru
          _
        // Predicated region
        $region25: #{tpu_custom_call.1} parent=19 // pred_check
          %p228 = pneg %p82
        $region26: #{tpu_custom_call.1} parent=19 // pred_check_branch
          %230 = sbr.rel (%p228) target = $region28
        $region27: #{tpu_custom_call.1} parent=19 // pred_region
          %s231 = sadd.s32 %s26, 1
          %s232 = smul.u32 32, %s231
          %p233 = scmp.lt.s32.totalorder %s25, 1
          %s234 = scalar_select %p233, %s25, 1
          %p235 = scmp.lt.s32.totalorder %s232, 63
          %s236 = scalar_select %p235, %s232, 63
          %s237 = smul.addr %s234, 64
          %s238 = sadd.s32 %s236, %s237
          %s239 = smul.addr %s238, 4
          %s240 = scalar_lea.vmem %s1, %s239
          %s241 = sadd.s32 %s26, 1
          %s242 = smul.u32 32, %s241
        $region28: #{tpu_custom_call.1} parent=19 // pred_fallthru
          _
      $region20: #{tpu_custom_call.1} parent=5 // pred_fallthru
        _
      %p243 = scmp.le.s32.totalorder 1, %s18
      %p244 = scmp.lt.s32.totalorder %s18, 3
      %p245 = pnand %p243, %p244
      %p246 = pneg %p245
      // Predicated region
      $region29: #{tpu_custom_call.1} parent=5 // pred_check
        _
      $region30: #{tpu_custom_call.1} parent=5 // pred_check_branch
        %248 = sbr.rel (%p245) target = $region32
      $region31: #{tpu_custom_call.1} parent=5 // pred_region
        %s249 = ssub.s32 %s18, 1
        %s250 = smul.u32 32, %s28
        %p251 = scmp.lt.s32.totalorder %s27, 1
        %s252 = scalar_select %p251, %s27, 1
        %p253 = scmp.lt.s32.totalorder %s250, 63
        %s254 = scalar_select %p253, %s250, 63
        %s255 = smul.addr %s252, 64
        %s256 = sadd.s32 %s254, %s255
        %s257 = smul.addr %s256, 4
        %s258 = scalar_lea.vmem %s0, %s257
        %p259 = pneg %p58
        %p260 = pneg %p55
        %s261 = sadd.s32 %s28, 1
        %s262 = smul.u32 32, %s261
        %p263 = scmp.lt.s32.totalorder %s27, 1
        %s264 = scalar_select %p263, %s27, 1
        %p265 = scmp.lt.s32.totalorder %s262, 63
        %s266 = scalar_select %p265, %s262, 63
        %s267 = smul.addr %s264, 64
        %s268 = sadd.s32 %s266, %s267
        %s269 = smul.addr %s268, 4
        %s270 = scalar_lea.vmem %s1, %s269
        %p271 = pneg %p88
        %p272 = pneg %p85
        %p273 = pneg %p109
        %p274 = pneg %p106
        %p275 = pneg %p137
        %p276 = pneg %p134
        %s277 = sand.u32 %s124, 1
        %s278 = scalar_lea.sflag [#allocation4], %s277
        %s279 = sand.u32 %s124, 1
        %s280 = smul.addr %s279, 256
        %s281 = scalar_lea.vmem [#allocation3], %s280
        %p282 = pneg %p165
        %p283 = pneg %p162
        %s284 = sand.u32 %s23, 1
        %s285 = scalar_lea.sflag [#allocation6], %s284
        %s286 = sand.u32 %s152, 1
        %s287 = smul.addr %s286, 128
        %s288 = scalar_lea.vmem [#allocation5], %s287
        %p289 = pneg %p193
        %p290 = pneg %p190
        %s291 = sand.u32 %s23, 1
        %s292 = scalar_lea.sflag [#allocation6], %s291
        %s293 = sand.u32 %s180, 1
        %s294 = smul.addr %s293, 128
        %s295 = scalar_lea.vmem [#allocation7], %s294
        %s296 = smul.u32 32, %s28
        %p297 = scmp.lt.s32.totalorder %s27, 1
        %s298 = scalar_select %p297, %s27, 1
        %p299 = scmp.lt.s32.totalorder %s296, 63
        %s300 = scalar_select %p299, %s296, 63
        %s301 = smul.addr %s298, 64
        %s302 = sadd.s32 %s300, %s301
        %s303 = smul.addr %s302, 4
        %s304 = scalar_lea.vmem %s0, %s303
        %s305 = smul.u32 32, %s28
        %s306 = sadd.s32 %s28, 1
        %s307 = smul.u32 32, %s306
        %p308 = scmp.lt.s32.totalorder %s27, 1
        %s309 = scalar_select %p308, %s27, 1
        %p310 = scmp.lt.s32.totalorder %s307, 63
        %s311 = scalar_select %p310, %s307, 63
        %s312 = smul.addr %s309, 64
        %s313 = sadd.s32 %s311, %s312
        %s314 = smul.addr %s313, 4
        %s315 = scalar_lea.vmem %s1, %s314
        %s316 = sadd.s32 %s28, 1
        %s317 = smul.u32 32, %s316
        %s318 = smul.u32 32, %s28
        %s319 = smul.u32 32, %s28
        %s320 = smul.u32 32, %s28
        %vm322 = vcmask 1047680
        %323 = vst.msk [vmem:[#allocation2] sm:$0xff] %vm322, 0
        %324 = vst.msk [vmem:[#allocation2 + $0x8] sm:$0xff] %vm322, 0
        %325 = vst.msk [vmem:[#allocation2 + $0x10] sm:$0xff] %vm322, 0
        %326 = vst.msk [vmem:[#allocation2 + $0x18] sm:$0xff] %vm322, 0
        %327 = vst.msk [vmem:[#allocation2 + $0x20] sm:$0xff] %vm322, 0
        %328 = vst.msk [vmem:[#allocation2 + $0x28] sm:$0xff] %vm322, 0
        %329 = vst.msk [vmem:[#allocation2 + $0x30] sm:$0xff] %vm322, 0
        %330 = vst.msk [vmem:[#allocation2 + $0x38] sm:$0xff] %vm322, 0
        %331 = vst.msk [vmem:[#allocation2 + $0x40] sm:$0xff] %vm322, 0
        %332 = vst.msk [vmem:[#allocation2 + $0x48] sm:$0xff] %vm322, 0
        %333 = vst.msk [vmem:[#allocation2 + $0x50] sm:$0xff] %vm322, 0
        %334 = vst.msk [vmem:[#allocation2 + $0x58] sm:$0xff] %vm322, 0
        %335 = vst.msk [vmem:[#allocation2 + $0x60] sm:$0xff] %vm322, 0
        %336 = vst.msk [vmem:[#allocation2 + $0x68] sm:$0xff] %vm322, 0
        %337 = vst.msk [vmem:[#allocation2 + $0x70] sm:$0xff] %vm322, 0
        %338 = vst.msk [vmem:[#allocation2 + $0x78] sm:$0xff] %vm322, 0
        %v339 = vld [vmem:[%s304] sm:$0xf]
        %v340 = vld [vmem:[%s304 + $0x4] sm:$0xf]
        %v341 = vld [vmem:[%s304 + $0x8] sm:$0xf]
        %v342 = vld [vmem:[%s304 + $0xc] sm:$0xf]
        %v343 = vld [vmem:[%s304 + $0x10] sm:$0xf]
        %v344 = vld [vmem:[%s304 + $0x14] sm:$0xf]
        %v345 = vld [vmem:[%s304 + $0x18] sm:$0xf]
        %v346 = vld [vmem:[%s304 + $0x1c] sm:$0xf]
        %v347 = vld [vmem:[%s304 + $0x20] sm:$0xf]
        %v348 = vld [vmem:[%s304 + $0x24] sm:$0xf]
        %v349 = vld [vmem:[%s304 + $0x28] sm:$0xf]
        %v350 = vld [vmem:[%s304 + $0x2c] sm:$0xf]
        %v351 = vld [vmem:[%s304 + $0x30] sm:$0xf]
        %v352 = vld [vmem:[%s304 + $0x34] sm:$0xf]
        %v353 = vld [vmem:[%s304 + $0x38] sm:$0xf]
        %v354 = vld [vmem:[%s304 + $0x3c] sm:$0xf]
        %v355 = vld [vmem:[%s304 + $0x40] sm:$0xf]
        %v356 = vld [vmem:[%s304 + $0x44] sm:$0xf]
        %v357 = vld [vmem:[%s304 + $0x48] sm:$0xf]
        %v358 = vld [vmem:[%s304 + $0x4c] sm:$0xf]
        %v359 = vld [vmem:[%s304 + $0x50] sm:$0xf]
        %v360 = vld [vmem:[%s304 + $0x54] sm:$0xf]
        %v361 = vld [vmem:[%s304 + $0x58] sm:$0xf]
        %v362 = vld [vmem:[%s304 + $0x5c] sm:$0xf]
        %v363 = vld [vmem:[%s304 + $0x60] sm:$0xf]
        %v364 = vld [vmem:[%s304 + $0x64] sm:$0xf]
        %v365 = vld [vmem:[%s304 + $0x68] sm:$0xf]
        %v366 = vld [vmem:[%s304 + $0x6c] sm:$0xf]
        %v367 = vld [vmem:[%s304 + $0x70] sm:$0xf]
        %v368 = vld [vmem:[%s304 + $0x74] sm:$0xf]
        %v369 = vld [vmem:[%s304 + $0x78] sm:$0xf]
        %v370 = vld [vmem:[%s304 + $0x7c] sm:$0xf]
        %v403 = vunpack.c.l.b16 %v339
        %v404 = vunpack.c.l.b16 %v340
        %v405 = vunpack.c.l.b16 %v341
        %v406 = vunpack.c.l.b16 %v342
        %v407 = vunpack.c.l.b16 %v343
        %v408 = vunpack.c.l.b16 %v344
        %v409 = vunpack.c.l.b16 %v345
        %v410 = vunpack.c.l.b16 %v346
        %v411 = vunpack.c.l.b16 %v347
        %v412 = vunpack.c.l.b16 %v348
        %v413 = vunpack.c.l.b16 %v349
        %v414 = vunpack.c.l.b16 %v350
        %v415 = vunpack.c.l.b16 %v351
        %v416 = vunpack.c.l.b16 %v352
        %v417 = vunpack.c.l.b16 %v353
        %v418 = vunpack.c.l.b16 %v354
        %v419 = vunpack.c.l.b16 %v355
        %v420 = vunpack.c.l.b16 %v356
        %v421 = vunpack.c.l.b16 %v357
        %v422 = vunpack.c.l.b16 %v358
        %v423 = vunpack.c.l.b16 %v359
        %v424 = vunpack.c.l.b16 %v360
        %v425 = vunpack.c.l.b16 %v361
        %v426 = vunpack.c.l.b16 %v362
        %v427 = vunpack.c.l.b16 %v363
        %v428 = vunpack.c.l.b16 %v364
        %v429 = vunpack.c.l.b16 %v365
        %v430 = vunpack.c.l.b16 %v366
        %v431 = vunpack.c.l.b16 %v367
        %v432 = vunpack.c.l.b16 %v368
        %v433 = vunpack.c.l.b16 %v369
        %v434 = vunpack.c.l.b16 %v370
        %v435 = vpack.c.b16 %v404, %v403
        %v436 = vpack.c.b16 %v406, %v405
        %v437 = vpack.c.b16 %v408, %v407
        %v438 = vpack.c.b16 %v410, %v409
        %v439 = vpack.c.b16 %v412, %v411
        %v440 = vpack.c.b16 %v414, %v413
        %v441 = vpack.c.b16 %v416, %v415
        %v442 = vpack.c.b16 %v418, %v417
        %v443 = vpack.c.b16 %v420, %v419
        %v444 = vpack.c.b16 %v422, %v421
        %v445 = vpack.c.b16 %v424, %v423
        %v446 = vpack.c.b16 %v426, %v425
        %v447 = vpack.c.b16 %v428, %v427
        %v448 = vpack.c.b16 %v430, %v429
        %v449 = vpack.c.b16 %v432, %v431
        %v450 = vpack.c.b16 %v434, %v433
        %vm467 = vcmask 31744
        %468 = vst.msk [vmem:[#allocation2] sm:$0xff] %vm467, %v435
        %469 = vst.msk [vmem:[#allocation2 + $0x8] sm:$0xff] %vm467, %v436
        %470 = vst.msk [vmem:[#allocation2 + $0x10] sm:$0xff] %vm467, %v437
        %471 = vst.msk [vmem:[#allocation2 + $0x18] sm:$0xff] %vm467, %v438
        %472 = vst.msk [vmem:[#allocation2 + $0x20] sm:$0xff] %vm467, %v439
        %473 = vst.msk [vmem:[#allocation2 + $0x28] sm:$0xff] %vm467, %v440
        %474 = vst.msk [vmem:[#allocation2 + $0x30] sm:$0xff] %vm467, %v441
        %475 = vst.msk [vmem:[#allocation2 + $0x38] sm:$0xff] %vm467, %v442
        %476 = vst.msk [vmem:[#allocation2 + $0x40] sm:$0xff] %vm467, %v443
        %477 = vst.msk [vmem:[#allocation2 + $0x48] sm:$0xff] %vm467, %v444
        %478 = vst.msk [vmem:[#allocation2 + $0x50] sm:$0xff] %vm467, %v445
        %479 = vst.msk [vmem:[#allocation2 + $0x58] sm:$0xff] %vm467, %v446
        %480 = vst.msk [vmem:[#allocation2 + $0x60] sm:$0xff] %vm467, %v447
        %481 = vst.msk [vmem:[#allocation2 + $0x68] sm:$0xff] %vm467, %v448
        %482 = vst.msk [vmem:[#allocation2 + $0x70] sm:$0xff] %vm467, %v449
        %483 = vst.msk [vmem:[#allocation2 + $0x78] sm:$0xff] %vm467, %v450
        %v484 = vld [vmem:[%s304] sm:$0xf]
        %v485 = vld [vmem:[%s304 + $0x4] sm:$0xf]
        %v486 = vld [vmem:[%s304 + $0x8] sm:$0xf]
        %v487 = vld [vmem:[%s304 + $0xc] sm:$0xf]
        %v488 = vld [vmem:[%s304 + $0x10] sm:$0xf]
        %v489 = vld [vmem:[%s304 + $0x14] sm:$0xf]
        %v490 = vld [vmem:[%s304 + $0x18] sm:$0xf]
        %v491 = vld [vmem:[%s304 + $0x1c] sm:$0xf]
        %v492 = vld [vmem:[%s304 + $0x20] sm:$0xf]
        %v493 = vld [vmem:[%s304 + $0x24] sm:$0xf]
        %v494 = vld [vmem:[%s304 + $0x28] sm:$0xf]
        %v495 = vld [vmem:[%s304 + $0x2c] sm:$0xf]
        %v496 = vld [vmem:[%s304 + $0x30] sm:$0xf]
        %v497 = vld [vmem:[%s304 + $0x34] sm:$0xf]
        %v498 = vld [vmem:[%s304 + $0x38] sm:$0xf]
        %v499 = vld [vmem:[%s304 + $0x3c] sm:$0xf]
        %v500 = vld [vmem:[%s304 + $0x40] sm:$0xf]
        %v501 = vld [vmem:[%s304 + $0x44] sm:$0xf]
        %v502 = vld [vmem:[%s304 + $0x48] sm:$0xf]
        %v503 = vld [vmem:[%s304 + $0x4c] sm:$0xf]
        %v504 = vld [vmem:[%s304 + $0x50] sm:$0xf]
        %v505 = vld [vmem:[%s304 + $0x54] sm:$0xf]
        %v506 = vld [vmem:[%s304 + $0x58] sm:$0xf]
        %v507 = vld [vmem:[%s304 + $0x5c] sm:$0xf]
        %v508 = vld [vmem:[%s304 + $0x60] sm:$0xf]
        %v509 = vld [vmem:[%s304 + $0x64] sm:$0xf]
        %v510 = vld [vmem:[%s304 + $0x68] sm:$0xf]
        %v511 = vld [vmem:[%s304 + $0x6c] sm:$0xf]
        %v512 = vld [vmem:[%s304 + $0x70] sm:$0xf]
        %v513 = vld [vmem:[%s304 + $0x74] sm:$0xf]
        %v514 = vld [vmem:[%s304 + $0x78] sm:$0xf]
        %v515 = vld [vmem:[%s304 + $0x7c] sm:$0xf]
        %v548 = vunpack.c.l.b16 %v484
        %v549 = vunpack.c.l.b16 %v485
        %v550 = vunpack.c.l.b16 %v486
        %v551 = vunpack.c.l.b16 %v487
        %v552 = vunpack.c.l.b16 %v488
        %v553 = vunpack.c.l.b16 %v489
        %v554 = vunpack.c.l.b16 %v490
        %v555 = vunpack.c.l.b16 %v491
        %v556 = vunpack.c.l.b16 %v492
        %v557 = vunpack.c.l.b16 %v493
        %v558 = vunpack.c.l.b16 %v494
        %v559 = vunpack.c.l.b16 %v495
        %v560 = vunpack.c.l.b16 %v496
        %v561 = vunpack.c.l.b16 %v497
        %v562 = vunpack.c.l.b16 %v498
        %v563 = vunpack.c.l.b16 %v499
        %v564 = vunpack.c.l.b16 %v500
        %v565 = vunpack.c.l.b16 %v501
        %v566 = vunpack.c.l.b16 %v502
        %v567 = vunpack.c.l.b16 %v503
        %v568 = vunpack.c.l.b16 %v504
        %v569 = vunpack.c.l.b16 %v505
        %v570 = vunpack.c.l.b16 %v506
        %v571 = vunpack.c.l.b16 %v507
        %v572 = vunpack.c.l.b16 %v508
        %v573 = vunpack.c.l.b16 %v509
        %v574 = vunpack.c.l.b16 %v510
        %v575 = vunpack.c.l.b16 %v511
        %v576 = vunpack.c.l.b16 %v512
        %v577 = vunpack.c.l.b16 %v513
        %v578 = vunpack.c.l.b16 %v514
        %v579 = vunpack.c.l.b16 %v515
        %v580 = vpack.c.b16 %v549, %v548
        %v581 = vpack.c.b16 %v551, %v550
        %v582 = vpack.c.b16 %v553, %v552
        %v583 = vpack.c.b16 %v555, %v554
        %v584 = vpack.c.b16 %v557, %v556
        %v585 = vpack.c.b16 %v559, %v558
        %v586 = vpack.c.b16 %v561, %v560
        %v587 = vpack.c.b16 %v563, %v562
        %v588 = vpack.c.b16 %v565, %v564
        %v589 = vpack.c.b16 %v567, %v566
        %v590 = vpack.c.b16 %v569, %v568
        %v591 = vpack.c.b16 %v571, %v570
        %v592 = vpack.c.b16 %v573, %v572
        %v593 = vpack.c.b16 %v575, %v574
        %v594 = vpack.c.b16 %v577, %v576
        %v595 = vpack.c.b16 %v579, %v578
        %vm596 = vsmask.f32 7424
        %v598 = vshrl.u32 %v580, 16
        %v600 = vshll.u32 %v580, 16
        %v602 = vrot.slane %v600, 1
        %v603 = vor.u32 %v598, %v602
        %v605 = vshll.u32 %v581, 16
        %v607 = vrot.slane %v605, 1
        %v608 = vsel %vm596, %v603, %v607
        %v609 = vshrl.u32 %v581, 16
        %v611 = vor.u32 %v609, %v607
        %v613 = vshll.u32 %v582, 16
        %v615 = vrot.slane %v613, 1
        %v616 = vsel %vm596, %v611, %v615
        %v617 = vshrl.u32 %v582, 16
        %v619 = vor.u32 %v617, %v615
        %v621 = vshll.u32 %v583, 16
        %v623 = vrot.slane %v621, 1
        %v624 = vsel %vm596, %v619, %v623
        %v625 = vshrl.u32 %v583, 16
        %v627 = vor.u32 %v625, %v623
        %v629 = vshll.u32 %v584, 16
        %v631 = vrot.slane %v629, 1
        %v632 = vsel %vm596, %v627, %v631
        %v633 = vshrl.u32 %v584, 16
        %v635 = vor.u32 %v633, %v631
        %v637 = vshll.u32 %v585, 16
        %v639 = vrot.slane %v637, 1
        %v640 = vsel %vm596, %v635, %v639
        %v641 = vshrl.u32 %v585, 16
        %v643 = vor.u32 %v641, %v639
        %v645 = vshll.u32 %v586, 16
        %v647 = vrot.slane %v645, 1
        %v648 = vsel %vm596, %v643, %v647
        %v649 = vshrl.u32 %v586, 16
        %v651 = vor.u32 %v649, %v647
        %v653 = vshll.u32 %v587, 16
        %v655 = vrot.slane %v653, 1
        %v656 = vsel %vm596, %v651, %v655
        %v657 = vshrl.u32 %v587, 16
        %v659 = vor.u32 %v657, %v655
        %v661 = vshll.u32 %v588, 16
        %v663 = vrot.slane %v661, 1
        %v664 = vsel %vm596, %v659, %v663
        %v665 = vshrl.u32 %v588, 16
        %v667 = vor.u32 %v665, %v663
        %v669 = vshll.u32 %v589, 16
        %v671 = vrot.slane %v669, 1
        %v672 = vsel %vm596, %v667, %v671
        %v673 = vshrl.u32 %v589, 16
        %v675 = vor.u32 %v673, %v671
        %v677 = vshll.u32 %v590, 16
        %v679 = vrot.slane %v677, 1
        %v680 = vsel %vm596, %v675, %v679
        %v681 = vshrl.u32 %v590, 16
        %v683 = vor.u32 %v681, %v679
        %v685 = vshll.u32 %v591, 16
        %v687 = vrot.slane %v685, 1
        %v688 = vsel %vm596, %v683, %v687
        %v689 = vshrl.u32 %v591, 16
        %v691 = vor.u32 %v689, %v687
        %v693 = vshll.u32 %v592, 16
        %v695 = vrot.slane %v693, 1
        %v696 = vsel %vm596, %v691, %v695
        %v697 = vshrl.u32 %v592, 16
        %v699 = vor.u32 %v697, %v695
        %v701 = vshll.u32 %v593, 16
        %v703 = vrot.slane %v701, 1
        %v704 = vsel %vm596, %v699, %v703
        %v705 = vshrl.u32 %v593, 16
        %v707 = vor.u32 %v705, %v703
        %v709 = vshll.u32 %v594, 16
        %v711 = vrot.slane %v709, 1
        %v712 = vsel %vm596, %v707, %v711
        %v713 = vshrl.u32 %v594, 16
        %v715 = vor.u32 %v713, %v711
        %v717 = vshll.u32 %v595, 16
        %v719 = vrot.slane %v717, 1
        %v720 = vsel %vm596, %v715, %v719
        %v721 = vshrl.u32 %v595, 16
        %v723 = vor.u32 %v721, %v719
        %724 = vrot.lane.b32.xlu0 %v608, 4
        %v725 = vpop.permute.xlu0 %724
        %726 = vrot.lane.b32.xlu0 %v616, 4
        %v727 = vpop.permute.xlu0 %726
        %728 = vrot.lane.b32.xlu0 %v624, 4
        %v729 = vpop.permute.xlu0 %728
        %730 = vrot.lane.b32.xlu0 %v632, 4
        %v731 = vpop.permute.xlu0 %730
        %732 = vrot.lane.b32.xlu0 %v640, 4
        %v733 = vpop.permute.xlu0 %732
        %734 = vrot.lane.b32.xlu0 %v648, 4
        %v735 = vpop.permute.xlu0 %734
        %736 = vrot.lane.b32.xlu0 %v656, 4
        %v737 = vpop.permute.xlu0 %736
        %738 = vrot.lane.b32.xlu0 %v664, 4
        %v739 = vpop.permute.xlu0 %738
        %740 = vrot.lane.b32.xlu0 %v672, 4
        %v741 = vpop.permute.xlu0 %740
        %742 = vrot.lane.b32.xlu0 %v680, 4
        %v743 = vpop.permute.xlu0 %742
        %744 = vrot.lane.b32.xlu0 %v688, 4
        %v745 = vpop.permute.xlu0 %744
        %746 = vrot.lane.b32.xlu0 %v696, 4
        %v747 = vpop.permute.xlu0 %746
        %748 = vrot.lane.b32.xlu0 %v704, 4
        %v749 = vpop.permute.xlu0 %748
        %750 = vrot.lane.b32.xlu0 %v712, 4
        %v751 = vpop.permute.xlu0 %750
        %752 = vrot.lane.b32.xlu0 %v720, 4
        %v753 = vpop.permute.xlu0 %752
        %754 = vrot.lane.b32.xlu0 %v723, 4
        %v755 = vpop.permute.xlu0 %754
        %vm772 = vcmask 64544
        %773 = vst.msk [vmem:[#allocation2] sm:$0xff] %vm772, %v725
        %774 = vst.msk [vmem:[#allocation2 + $0x8] sm:$0xff] %vm772, %v727
        %775 = vst.msk [vmem:[#allocation2 + $0x10] sm:$0xff] %vm772, %v729
        %776 = vst.msk [vmem:[#allocation2 + $0x18] sm:$0xff] %vm772, %v731
        %777 = vst.msk [vmem:[#allocation2 + $0x20] sm:$0xff] %vm772, %v733
        %778 = vst.msk [vmem:[#allocation2 + $0x28] sm:$0xff] %vm772, %v735
        %779 = vst.msk [vmem:[#allocation2 + $0x30] sm:$0xff] %vm772, %v737
        %780 = vst.msk [vmem:[#allocation2 + $0x38] sm:$0xff] %vm772, %v739
        %781 = vst.msk [vmem:[#allocation2 + $0x40] sm:$0xff] %vm772, %v741
        %782 = vst.msk [vmem:[#allocation2 + $0x48] sm:$0xff] %vm772, %v743
        %783 = vst.msk [vmem:[#allocation2 + $0x50] sm:$0xff] %vm772, %v745
        %784 = vst.msk [vmem:[#allocation2 + $0x58] sm:$0xff] %vm772, %v747
        %785 = vst.msk [vmem:[#allocation2 + $0x60] sm:$0xff] %vm772, %v749
        %786 = vst.msk [vmem:[#allocation2 + $0x68] sm:$0xff] %vm772, %v751
        %787 = vst.msk [vmem:[#allocation2 + $0x70] sm:$0xff] %vm772, %v753
        %vm788 = vcmask 64544
        %vm789 = vmand %vm788, %vm596
        %v790 = vld [vmem:[#allocation2 + $0x78] sm:$0xff]
        %v791 = vsel %vm789, %v755, %v790
        %792 = vst [vmem:[#allocation2 + $0x78] sm:$0xff] %v791
        %v793 = vld [vmem:[%s315] sm:$0x1]
        %v795 = vunpack.c.l.b16 %v793
        %v796 = vpack.c.b16 %v795, %v795
        %v798 = vshll.u32 %v796, 16
        %v800 = vrot.slane %v798, 1
        %801 = vrot.lane.b32.xlu0 %v800, 4
        %v802 = vpop.permute.xlu0 %801
        %vm804 = vcmask 64551
        %vm805 = vsmask.f32 7966
        %vm806 = vmand %vm804, %vm805
        %v807 = vld [vmem:[#allocation2 + $0x78] sm:$0x80]
        %v808 = vsel %vm806, %v802, %v807
        %809 = vst [vmem:[#allocation2 + $0x78] sm:$0x80] %v808
        %v810 = vld [vmem:[%s304] sm:$0xe]
        %v811 = vld [vmem:[%s304 + $0x4] sm:$0xf]
        %v812 = vld [vmem:[%s304 + $0x8] sm:$0xf]
        %v813 = vld [vmem:[%s304 + $0xc] sm:$0xf]
        %v814 = vld [vmem:[%s304 + $0x10] sm:$0xf]
        %v815 = vld [vmem:[%s304 + $0x14] sm:$0xf]
        %v816 = vld [vmem:[%s304 + $0x18] sm:$0xf]
        %v817 = vld [vmem:[%s304 + $0x1c] sm:$0xf]
        %v818 = vld [vmem:[%s304 + $0x20] sm:$0xf]
        %v819 = vld [vmem:[%s304 + $0x24] sm:$0xf]
        %v820 = vld [vmem:[%s304 + $0x28] sm:$0xf]
        %v821 = vld [vmem:[%s304 + $0x2c] sm:$0xf]
        %v822 = vld [vmem:[%s304 + $0x30] sm:$0xf]
        %v823 = vld [vmem:[%s304 + $0x34] sm:$0xf]
        %v824 = vld [vmem:[%s304 + $0x38] sm:$0xf]
        %v825 = vld [vmem:[%s304 + $0x3c] sm:$0xf]
        %v826 = vld [vmem:[%s304 + $0x40] sm:$0xf]
        %v827 = vld [vmem:[%s304 + $0x44] sm:$0xf]
        %v828 = vld [vmem:[%s304 + $0x48] sm:$0xf]
        %v829 = vld [vmem:[%s304 + $0x4c] sm:$0xf]
        %v830 = vld [vmem:[%s304 + $0x50] sm:$0xf]
        %v831 = vld [vmem:[%s304 + $0x54] sm:$0xf]
        %v832 = vld [vmem:[%s304 + $0x58] sm:$0xf]
        %v833 = vld [vmem:[%s304 + $0x5c] sm:$0xf]
        %v834 = vld [vmem:[%s304 + $0x60] sm:$0xf]
        %v835 = vld [vmem:[%s304 + $0x64] sm:$0xf]
        %v836 = vld [vmem:[%s304 + $0x68] sm:$0xf]
        %v837 = vld [vmem:[%s304 + $0x6c] sm:$0xf]
        %v838 = vld [vmem:[%s304 + $0x70] sm:$0xf]
        %v839 = vld [vmem:[%s304 + $0x74] sm:$0xf]
        %v840 = vld [vmem:[%s304 + $0x78] sm:$0xf]
        %v841 = vld [vmem:[%s304 + $0x7c] sm:$0xf]
        %v874 = vunpack.c.l.b16 %v810
        %v875 = vunpack.c.l.b16 %v811
        %v876 = vunpack.c.l.b16 %v812
        %v877 = vunpack.c.l.b16 %v813
        %v878 = vunpack.c.l.b16 %v814
        %v879 = vunpack.c.l.b16 %v815
        %v880 = vunpack.c.l.b16 %v816
        %v881 = vunpack.c.l.b16 %v817
        %v882 = vunpack.c.l.b16 %v818
        %v883 = vunpack.c.l.b16 %v819
        %v884 = vunpack.c.l.b16 %v820
        %v885 = vunpack.c.l.b16 %v821
        %v886 = vunpack.c.l.b16 %v822
        %v887 = vunpack.c.l.b16 %v823
        %v888 = vunpack.c.l.b16 %v824
        %v889 = vunpack.c.l.b16 %v825
        %v890 = vunpack.c.l.b16 %v826
        %v891 = vunpack.c.l.b16 %v827
        %v892 = vunpack.c.l.b16 %v828
        %v893 = vunpack.c.l.b16 %v829
        %v894 = vunpack.c.l.b16 %v830
        %v895 = vunpack.c.l.b16 %v831
        %v896 = vunpack.c.l.b16 %v832
        %v897 = vunpack.c.l.b16 %v833
        %v898 = vunpack.c.l.b16 %v834
        %v899 = vunpack.c.l.b16 %v835
        %v900 = vunpack.c.l.b16 %v836
        %v901 = vunpack.c.l.b16 %v837
        %v902 = vunpack.c.l.b16 %v838
        %v903 = vunpack.c.l.b16 %v839
        %v904 = vunpack.c.l.b16 %v840
        %v905 = vunpack.c.l.b16 %v841
        %v906 = vpack.c.b16 %v875, %v874
        %v907 = vpack.c.b16 %v877, %v876
        %v908 = vpack.c.b16 %v879, %v878
        %v909 = vpack.c.b16 %v881, %v880
        %v910 = vpack.c.b16 %v883, %v882
        %v911 = vpack.c.b16 %v885, %v884
        %v912 = vpack.c.b16 %v887, %v886
        %v913 = vpack.c.b16 %v889, %v888
        %v914 = vpack.c.b16 %v891, %v890
        %v915 = vpack.c.b16 %v893, %v892
        %v916 = vpack.c.b16 %v895, %v894
        %v917 = vpack.c.b16 %v897, %v896
        %v918 = vpack.c.b16 %v899, %v898
        %v919 = vpack.c.b16 %v901, %v900
        %v920 = vpack.c.b16 %v903, %v902
        %v921 = vpack.c.b16 %v905, %v904
        %vm922 = vcmask 1046528
        %v923 = vrot.slane %v906, 1
        %v924 = vrot.slane %v907, 1
        %v925 = vsel %vm922, %v923, %v924
        %v926 = vrot.slane %v908, 1
        %v927 = vsel %vm922, %v924, %v926
        %v928 = vrot.slane %v909, 1
        %v929 = vsel %vm922, %v926, %v928
        %v930 = vrot.slane %v910, 1
        %v931 = vsel %vm922, %v928, %v930
        %v932 = vrot.slane %v911, 1
        %v933 = vsel %vm922, %v930, %v932
        %v934 = vrot.slane %v912, 1
        %v935 = vsel %vm922, %v932, %v934
        %v936 = vrot.slane %v913, 1
        %v937 = vsel %vm922, %v934, %v936
        %v938 = vrot.slane %v914, 1
        %v939 = vsel %vm922, %v936, %v938
        %v940 = vrot.slane %v915, 1
        %v941 = vsel %vm922, %v938, %v940
        %v942 = vrot.slane %v916, 1
        %v943 = vsel %vm922, %v940, %v942
        %v944 = vrot.slane %v917, 1
        %v945 = vsel %vm922, %v942, %v944
        %v946 = vrot.slane %v918, 1
        %v947 = vsel %vm922, %v944, %v946
        %v948 = vrot.slane %v919, 1
        %v949 = vsel %vm922, %v946, %v948
        %v950 = vrot.slane %v920, 1
        %v951 = vsel %vm922, %v948, %v950
        %v952 = vrot.slane %v921, 1
        %v953 = vsel %vm922, %v950, %v952
        %954 = vrot.lane.b32.xlu0 %v925, 8
        %v955 = vpop.permute.xlu0 %954
        %956 = vrot.lane.b32.xlu0 %v927, 8
        %v957 = vpop.permute.xlu0 %956
        %958 = vrot.lane.b32.xlu0 %v929, 8
        %v959 = vpop.permute.xlu0 %958
        %960 = vrot.lane.b32.xlu0 %v931, 8
        %v961 = vpop.permute.xlu0 %960
        %962 = vrot.lane.b32.xlu0 %v933, 8
        %v963 = vpop.permute.xlu0 %962
        %964 = vrot.lane.b32.xlu0 %v935, 8
        %v965 = vpop.permute.xlu0 %964
        %966 = vrot.lane.b32.xlu0 %v937, 8
        %v967 = vpop.permute.xlu0 %966
        %968 = vrot.lane.b32.xlu0 %v939, 8
        %v969 = vpop.permute.xlu0 %968
        %970 = vrot.lane.b32.xlu0 %v941, 8
        %v971 = vpop.permute.xlu0 %970
        %972 = vrot.lane.b32.xlu0 %v943, 8
        %v973 = vpop.permute.xlu0 %972
        %974 = vrot.lane.b32.xlu0 %v945, 8
        %v975 = vpop.permute.xlu0 %974
        %976 = vrot.lane.b32.xlu0 %v947, 8
        %v977 = vpop.permute.xlu0 %976
        %978 = vrot.lane.b32.xlu0 %v949, 8
        %v979 = vpop.permute.xlu0 %978
        %980 = vrot.lane.b32.xlu0 %v951, 8
        %v981 = vpop.permute.xlu0 %980
        %982 = vrot.lane.b32.xlu0 %v953, 8
        %v983 = vpop.permute.xlu0 %982
        %984 = vrot.lane.b32.xlu0 %v952, 8
        %v985 = vpop.permute.xlu0 %984
        %vm1002 = vcmask 97344
        %1003 = vst.msk [vmem:[#allocation2] sm:$0xff] %vm1002, %v955
        %1004 = vst.msk [vmem:[#allocation2 + $0x8] sm:$0xff] %vm1002, %v957
        %1005 = vst.msk [vmem:[#allocation2 + $0x10] sm:$0xff] %vm1002, %v959
        %1006 = vst.msk [vmem:[#allocation2 + $0x18] sm:$0xff] %vm1002, %v961
        %1007 = vst.msk [vmem:[#allocation2 + $0x20] sm:$0xff] %vm1002, %v963
        %1008 = vst.msk [vmem:[#allocation2 + $0x28] sm:$0xff] %vm1002, %v965
        %1009 = vst.msk [vmem:[#allocation2 + $0x30] sm:$0xff] %vm1002, %v967
        %1010 = vst.msk [vmem:[#allocation2 + $0x38] sm:$0xff] %vm1002, %v969
        %1011 = vst.msk [vmem:[#allocation2 + $0x40] sm:$0xff] %vm1002, %v971
        %1012 = vst.msk [vmem:[#allocation2 + $0x48] sm:$0xff] %vm1002, %v973
        %1013 = vst.msk [vmem:[#allocation2 + $0x50] sm:$0xff] %vm1002, %v975
        %1014 = vst.msk [vmem:[#allocation2 + $0x58] sm:$0xff] %vm1002, %v977
        %1015 = vst.msk [vmem:[#allocation2 + $0x60] sm:$0xff] %vm1002, %v979
        %1016 = vst.msk [vmem:[#allocation2 + $0x68] sm:$0xff] %vm1002, %v981
        %1017 = vst.msk [vmem:[#allocation2 + $0x70] sm:$0xff] %vm1002, %v983
        %vm1018 = vcmask 96320
        %1019 = vst.msk [vmem:[#allocation2 + $0x78] sm:$0x7f] %vm1018, %v985
        %v1020 = vld [vmem:[%s315] sm:$0x1]
        %v1022 = vunpack.c.l.b16 %v1020
        %v1023 = vpack.c.b16 %v1022, %v1022
        %v1024 = vrot.slane %v1023, 1
        %1025 = vrot.lane.b32.xlu0 %v1024, 8
        %v1026 = vpop.permute.xlu0 %1025
        %vm1028 = vcmask 97351
        %1029 = vst.msk [vmem:[#allocation2 + $0x78] sm:$0x80] %vm1028, %v1026
        %v1030 = vld [vmem:[%s304] sm:$0xe]
        %v1031 = vld [vmem:[%s304 + $0x4] sm:$0xf]
        %v1032 = vld [vmem:[%s304 + $0x8] sm:$0xf]
        %v1033 = vld [vmem:[%s304 + $0xc] sm:$0xf]
        %v1034 = vld [vmem:[%s304 + $0x10] sm:$0xf]
        %v1035 = vld [vmem:[%s304 + $0x14] sm:$0xf]
        %v1036 = vld [vmem:[%s304 + $0x18] sm:$0xf]
        %v1037 = vld [vmem:[%s304 + $0x1c] sm:$0xf]
        %v1038 = vld [vmem:[%s304 + $0x20] sm:$0xf]
        %v1039 = vld [vmem:[%s304 + $0x24] sm:$0xf]
        %v1040 = vld [vmem:[%s304 + $0x28] sm:$0xf]
        %v1041 = vld [vmem:[%s304 + $0x2c] sm:$0xf]
        %v1042 = vld [vmem:[%s304 + $0x30] sm:$0xf]
        %v1043 = vld [vmem:[%s304 + $0x34] sm:$0xf]
        %v1044 = vld [vmem:[%s304 + $0x38] sm:$0xf]
        %v1045 = vld [vmem:[%s304 + $0x3c] sm:$0xf]
        %v1046 = vld [vmem:[%s304 + $0x40] sm:$0xf]
        %v1047 = vld [vmem:[%s304 + $0x44] sm:$0xf]
        %v1048 = vld [vmem:[%s304 + $0x48] sm:$0xf]
        %v1049 = vld [vmem:[%s304 + $0x4c] sm:$0xf]
        %v1050 = vld [vmem:[%s304 + $0x50] sm:$0xf]
        %v1051 = vld [vmem:[%s304 + $0x54] sm:$0xf]
        %v1052 = vld [vmem:[%s304 + $0x58] sm:$0xf]
        %v1053 = vld [vmem:[%s304 + $0x5c] sm:$0xf]
        %v1054 = vld [vmem:[%s304 + $0x60] sm:$0xf]
        %v1055 = vld [vmem:[%s304 + $0x64] sm:$0xf]
        %v1056 = vld [vmem:[%s304 + $0x68] sm:$0xf]
        %v1057 = vld [vmem:[%s304 + $0x6c] sm:$0xf]
        %v1058 = vld [vmem:[%s304 + $0x70] sm:$0xf]
        %v1059 = vld [vmem:[%s304 + $0x74] sm:$0xf]
        %v1060 = vld [vmem:[%s304 + $0x78] sm:$0xf]
        %v1061 = vld [vmem:[%s304 + $0x7c] sm:$0xf]
        %v1094 = vunpack.c.l.b16 %v1030
        %v1095 = vunpack.c.l.b16 %v1031
        %v1096 = vunpack.c.l.b16 %v1032
        %v1097 = vunpack.c.l.b16 %v1033
        %v1098 = vunpack.c.l.b16 %v1034
        %v1099 = vunpack.c.l.b16 %v1035
        %v1100 = vunpack.c.l.b16 %v1036
        %v1101 = vunpack.c.l.b16 %v1037
        %v1102 = vunpack.c.l.b16 %v1038
        %v1103 = vunpack.c.l.b16 %v1039
        %v1104 = vunpack.c.l.b16 %v1040
        %v1105 = vunpack.c.l.b16 %v1041
        %v1106 = vunpack.c.l.b16 %v1042
        %v1107 = vunpack.c.l.b16 %v1043
        %v1108 = vunpack.c.l.b16 %v1044
        %v1109 = vunpack.c.l.b16 %v1045
        %v1110 = vunpack.c.l.b16 %v1046
        %v1111 = vunpack.c.l.b16 %v1047
        %v1112 = vunpack.c.l.b16 %v1048
        %v1113 = vunpack.c.l.b16 %v1049
        %v1114 = vunpack.c.l.b16 %v1050
        %v1115 = vunpack.c.l.b16 %v1051
        %v1116 = vunpack.c.l.b16 %v1052
        %v1117 = vunpack.c.l.b16 %v1053
        %v1118 = vunpack.c.l.b16 %v1054
        %v1119 = vunpack.c.l.b16 %v1055
        %v1120 = vunpack.c.l.b16 %v1056
        %v1121 = vunpack.c.l.b16 %v1057
        %v1122 = vunpack.c.l.b16 %v1058
        %v1123 = vunpack.c.l.b16 %v1059
        %v1124 = vunpack.c.l.b16 %v1060
        %v1125 = vunpack.c.l.b16 %v1061
        %v1126 = vpack.c.b16 %v1095, %v1094
        %v1127 = vpack.c.b16 %v1097, %v1096
        %v1128 = vpack.c.b16 %v1099, %v1098
        %v1129 = vpack.c.b16 %v1101, %v1100
        %v1130 = vpack.c.b16 %v1103, %v1102
        %v1131 = vpack.c.b16 %v1105, %v1104
        %v1132 = vpack.c.b16 %v1107, %v1106
        %v1133 = vpack.c.b16 %v1109, %v1108
        %v1134 = vpack.c.b16 %v1111, %v1110
        %v1135 = vpack.c.b16 %v1113, %v1112
        %v1136 = vpack.c.b16 %v1115, %v1114
        %v1137 = vpack.c.b16 %v1117, %v1116
        %v1138 = vpack.c.b16 %v1119, %v1118
        %v1139 = vpack.c.b16 %v1121, %v1120
        %v1140 = vpack.c.b16 %v1123, %v1122
        %v1141 = vpack.c.b16 %v1125, %v1124
        %vm1142 = vsmask.f32 6400
        %v1144 = vshrl.u32 %v1126, 16
        %v1146 = vrot.slane %v1144, 1
        %v1147 = vshll.u32 %v1126, 16
        %v1149 = vrot.slane %v1147, 2
        %v1150 = vor.u32 %v1146, %v1149
        %v1152 = vshrl.u32 %v1127, 16
        %v1154 = vrot.slane %v1152, 1
        %v1155 = vshll.u32 %v1127, 16
        %v1157 = vrot.slane %v1155, 2
        %v1158 = vor.u32 %v1154, %v1157
        %v1159 = vsel %vm1142, %v1150, %v1158
        %v1161 = vshrl.u32 %v1128, 16
        %v1163 = vrot.slane %v1161, 1
        %v1164 = vshll.u32 %v1128, 16
        %v1166 = vrot.slane %v1164, 2
        %v1167 = vor.u32 %v1163, %v1166
        %v1168 = vsel %vm1142, %v1158, %v1167
        %v1170 = vshrl.u32 %v1129, 16
        %v1172 = vrot.slane %v1170, 1
        %v1173 = vshll.u32 %v1129, 16
        %v1175 = vrot.slane %v1173, 2
        %v1176 = vor.u32 %v1172, %v1175
        %v1177 = vsel %vm1142, %v1167, %v1176
        %v1179 = vshrl.u32 %v1130, 16
        %v1181 = vrot.slane %v1179, 1
        %v1182 = vshll.u32 %v1130, 16
        %v1184 = vrot.slane %v1182, 2
        %v1185 = vor.u32 %v1181, %v1184
        %v1186 = vsel %vm1142, %v1176, %v1185
        %v1188 = vshrl.u32 %v1131, 16
        %v1190 = vrot.slane %v1188, 1
        %v1191 = vshll.u32 %v1131, 16
        %v1193 = vrot.slane %v1191, 2
        %v1194 = vor.u32 %v1190, %v1193
        %v1195 = vsel %vm1142, %v1185, %v1194
        %v1197 = vshrl.u32 %v1132, 16
        %v1199 = vrot.slane %v1197, 1
        %v1200 = vshll.u32 %v1132, 16
        %v1202 = vrot.slane %v1200, 2
        %v1203 = vor.u32 %v1199, %v1202
        %v1204 = vsel %vm1142, %v1194, %v1203
        %v1206 = vshrl.u32 %v1133, 16
        %v1208 = vrot.slane %v1206, 1
        %v1209 = vshll.u32 %v1133, 16
        %v1211 = vrot.slane %v1209, 2
        %v1212 = vor.u32 %v1208, %v1211
        %v1213 = vsel %vm1142, %v1203, %v1212
        %v1215 = vshrl.u32 %v1134, 16
        %v1217 = vrot.slane %v1215, 1
        %v1218 = vshll.u32 %v1134, 16
        %v1220 = vrot.slane %v1218, 2
        %v1221 = vor.u32 %v1217, %v1220
        %v1222 = vsel %vm1142, %v1212, %v1221
        %v1224 = vshrl.u32 %v1135, 16
        %v1226 = vrot.slane %v1224, 1
        %v1227 = vshll.u32 %v1135, 16
        %v1229 = vrot.slane %v1227, 2
        %v1230 = vor.u32 %v1226, %v1229
        %v1231 = vsel %vm1142, %v1221, %v1230
        %v1233 = vshrl.u32 %v1136, 16
        %v1235 = vrot.slane %v1233, 1
        %v1236 = vshll.u32 %v1136, 16
        %v1238 = vrot.slane %v1236, 2
        %v1239 = vor.u32 %v1235, %v1238
        %v1240 = vsel %vm1142, %v1230, %v1239
        %v1242 = vshrl.u32 %v1137, 16
        %v1244 = vrot.slane %v1242, 1
        %v1245 = vshll.u32 %v1137, 16
        %v1247 = vrot.slane %v1245, 2
        %v1248 = vor.u32 %v1244, %v1247
        %v1249 = vsel %vm1142, %v1239, %v1248
        %v1251 = vshrl.u32 %v1138, 16
        %v1253 = vrot.slane %v1251, 1
        %v1254 = vshll.u32 %v1138, 16
        %v1256 = vrot.slane %v1254, 2
        %v1257 = vor.u32 %v1253, %v1256
        %v1258 = vsel %vm1142, %v1248, %v1257
        %v1260 = vshrl.u32 %v1139, 16
        %v1262 = vrot.slane %v1260, 1
        %v1263 = vshll.u32 %v1139, 16
        %v1265 = vrot.slane %v1263, 2
        %v1266 = vor.u32 %v1262, %v1265
        %v1267 = vsel %vm1142, %v1257, %v1266
        %v1269 = vshrl.u32 %v1140, 16
        %v1271 = vrot.slane %v1269, 1
        %v1272 = vshll.u32 %v1140, 16
        %v1274 = vrot.slane %v1272, 2
        %v1275 = vor.u32 %v1271, %v1274
        %v1276 = vsel %vm1142, %v1266, %v1275
        %v1278 = vshrl.u32 %v1141, 16
        %v1280 = vrot.slane %v1278, 1
        %v1281 = vshll.u32 %v1141, 16
        %v1283 = vrot.slane %v1281, 2
        %v1284 = vor.u32 %v1280, %v1283
        %v1285 = vsel %vm1142, %v1275, %v1284
        %1286 = vrot.lane.b32.xlu0 %v1159, 12
        %v1287 = vpop.permute.xlu0 %1286
        %1288 = vrot.lane.b32.xlu0 %v1168, 12
        %v1289 = vpop.permute.xlu0 %1288
        %1290 = vrot.lane.b32.xlu0 %v1177, 12
        %v1291 = vpop.permute.xlu0 %1290
        %1292 = vrot.lane.b32.xlu0 %v1186, 12
        %v1293 = vpop.permute.xlu0 %1292
        %1294 = vrot.lane.b32.xlu0 %v1195, 12
        %v1295 = vpop.permute.xlu0 %1294
        %1296 = vrot.lane.b32.xlu0 %v1204, 12
        %v1297 = vpop.permute.xlu0 %1296
        %1298 = vrot.lane.b32.xlu0 %v1213, 12
        %v1299 = vpop.permute.xlu0 %1298
        %1300 = vrot.lane.b32.xlu0 %v1222, 12
        %v1301 = vpop.permute.xlu0 %1300
        %1302 = vrot.lane.b32.xlu0 %v1231, 12
        %v1303 = vpop.permute.xlu0 %1302
        %1304 = vrot.lane.b32.xlu0 %v1240, 12
        %v1305 = vpop.permute.xlu0 %1304
        %1306 = vrot.lane.b32.xlu0 %v1249, 12
        %v1307 = vpop.permute.xlu0 %1306
        %1308 = vrot.lane.b32.xlu0 %v1258, 12
        %v1309 = vpop.permute.xlu0 %1308
        %1310 = vrot.lane.b32.xlu0 %v1267, 12
        %v1311 = vpop.permute.xlu0 %1310
        %1312 = vrot.lane.b32.xlu0 %v1276, 12
        %v1313 = vpop.permute.xlu0 %1312
        %1314 = vrot.lane.b32.xlu0 %v1285, 12
        %v1315 = vpop.permute.xlu0 %1314
        %1316 = vrot.lane.b32.xlu0 %v1284, 12
        %v1317 = vpop.permute.xlu0 %1316
        %vm1334 = vcmask 130144
        %1335 = vst.msk [vmem:[#allocation2] sm:$0xff] %vm1334, %v1287
        %1336 = vst.msk [vmem:[#allocation2 + $0x8] sm:$0xff] %vm1334, %v1289
        %1337 = vst.msk [vmem:[#allocation2 + $0x10] sm:$0xff] %vm1334, %v1291
        %1338 = vst.msk [vmem:[#allocation2 + $0x18] sm:$0xff] %vm1334, %v1293
        %1339 = vst.msk [vmem:[#allocation2 + $0x20] sm:$0xff] %vm1334, %v1295
        %1340 = vst.msk [vmem:[#allocation2 + $0x28] sm:$0xff] %vm1334, %v1297
        %1341 = vst.msk [vmem:[#allocation2 + $0x30] sm:$0xff] %vm1334, %v1299
        %1342 = vst.msk [vmem:[#allocation2 + $0x38] sm:$0xff] %vm1334, %v1301
        %1343 = vst.msk [vmem:[#allocation2 + $0x40] sm:$0xff] %vm1334, %v1303
        %1344 = vst.msk [vmem:[#allocation2 + $0x48] sm:$0xff] %vm1334, %v1305
        %1345 = vst.msk [vmem:[#allocation2 + $0x50] sm:$0xff] %vm1334, %v1307
        %1346 = vst.msk [vmem:[#allocation2 + $0x58] sm:$0xff] %vm1334, %v1309
        %1347 = vst.msk [vmem:[#allocation2 + $0x60] sm:$0xff] %vm1334, %v1311
        %1348 = vst.msk [vmem:[#allocation2 + $0x68] sm:$0xff] %vm1334, %v1313
        %1349 = vst.msk [vmem:[#allocation2 + $0x70] sm:$0xff] %vm1334, %v1315
        %vm1350 = vcmask 129120
        %vm1351 = vmand %vm1350, %vm1142
        %v1352 = vld [vmem:[#allocation2 + $0x78] sm:$0x7f]
        %v1353 = vsel %vm1351, %v1317, %v1352
        %1354 = vst [vmem:[#allocation2 + $0x78] sm:$0x7f] %v1353
        %v1355 = vld [vmem:[%s315] sm:$0x3]
        %v1357 = vunpack.c.l.b16 %v1355
        %v1358 = vpack.c.b16 %v1357, %v1357
        %v1360 = vshrl.u32 %v1358, 16
        %v1362 = vrot.slane %v1360, 1
        %v1363 = vshll.u32 %v1358, 16
        %v1365 = vrot.slane %v1363, 2
        %v1366 = vor.u32 %v1362, %v1365
        %1367 = vrot.lane.b32.xlu0 %v1366, 12
        %v1368 = vpop.permute.xlu0 %1367
        %vm1370 = vcmask 130150
        %vm1371 = vsmask.f32 7962
        %vm1372 = vmand %vm1370, %vm1371
        %v1373 = vld [vmem:[#allocation2 + $0x78] sm:$0xc0]
        %v1374 = vsel %vm1372, %v1368, %v1373
        %1375 = vst [vmem:[#allocation2 + $0x78] sm:$0xc0] %v1374
        %v1376 = vld [vmem:[#allocation2] sm:$0xff]
        %v1377 = vld [vmem:[#allocation2 + $0x8] sm:$0xff]
        %v1378 = vld [vmem:[#allocation2 + $0x10] sm:$0xff]
        %v1379 = vld [vmem:[#allocation2 + $0x18] sm:$0xff]
        %v1380 = vld [vmem:[#allocation2 + $0x20] sm:$0xff]
        %v1381 = vld [vmem:[#allocation2 + $0x28] sm:$0xff]
        %v1382 = vld [vmem:[#allocation2 + $0x30] sm:$0xff]
        %v1383 = vld [vmem:[#allocation2 + $0x38] sm:$0xff]
        %v1384 = vld [vmem:[#allocation2 + $0x40] sm:$0xff]
        %v1385 = vld [vmem:[#allocation2 + $0x48] sm:$0xff]
        %v1386 = vld [vmem:[#allocation2 + $0x50] sm:$0xff]
        %v1387 = vld [vmem:[#allocation2 + $0x58] sm:$0xff]
        %v1388 = vld [vmem:[#allocation2 + $0x60] sm:$0xff]
        %v1389 = vld [vmem:[#allocation2 + $0x68] sm:$0xff]
        %v1390 = vld [vmem:[#allocation2 + $0x70] sm:$0xff]
        %v1391 = vld [vmem:[#allocation2 + $0x78] sm:$0xff]
        %v1392 = vld [vmem:[%s2] sm:$0xff]
        %v1393 = vld [vmem:[%s2 + $0x8] sm:$0xff]
        %v1394 = vld [vmem:[%s2 + $0x10] sm:$0xff]
        %v1395 = vld [vmem:[%s2 + $0x18] sm:$0xff]
        %v1396 = vld [vmem:[%s2 + $0x20] sm:$0xff]
        %v1397 = vld [vmem:[%s2 + $0x28] sm:$0xff]
        %v1398 = vld [vmem:[%s2 + $0x30] sm:$0xff]
        %v1399 = vld [vmem:[%s2 + $0x38] sm:$0xff]
        %v1400 = vld [vmem:[%s2 + $0x40] sm:$0xff]
        %v1401 = vld [vmem:[%s2 + $0x48] sm:$0xff]
        %v1402 = vld [vmem:[%s2 + $0x50] sm:$0xff]
        %v1403 = vld [vmem:[%s2 + $0x58] sm:$0xff]
        %v1404 = vld [vmem:[%s2 + $0x60] sm:$0xff]
        %v1405 = vld [vmem:[%s2 + $0x68] sm:$0xff]
        %v1406 = vld [vmem:[%s2 + $0x70] sm:$0xff]
        %v1407 = vld [vmem:[%s2 + $0x78] sm:$0xff]
        %v1424 = vunpack.c.l.b16 %v1392
        %v1425 = vunpack.c.h.b16 %v1392
        %v1426 = vunpack.c.l.b16 %v1393
        %v1427 = vunpack.c.h.b16 %v1393
        %v1428 = vunpack.c.l.b16 %v1394
        %v1429 = vunpack.c.h.b16 %v1394
        %v1430 = vunpack.c.l.b16 %v1395
        %v1431 = vunpack.c.h.b16 %v1395
        %v1432 = vunpack.c.l.b16 %v1396
        %v1433 = vunpack.c.h.b16 %v1396
        %v1434 = vunpack.c.l.b16 %v1397
        %v1435 = vunpack.c.h.b16 %v1397
        %v1436 = vunpack.c.l.b16 %v1398
        %v1437 = vunpack.c.h.b16 %v1398
        %v1438 = vunpack.c.l.b16 %v1399
        %v1439 = vunpack.c.h.b16 %v1399
        %v1440 = vunpack.c.l.b16 %v1400
        %v1441 = vunpack.c.h.b16 %v1400
        %v1442 = vunpack.c.l.b16 %v1401
        %v1443 = vunpack.c.h.b16 %v1401
        %v1444 = vunpack.c.l.b16 %v1402
        %v1445 = vunpack.c.h.b16 %v1402
        %v1446 = vunpack.c.l.b16 %v1403
        %v1447 = vunpack.c.h.b16 %v1403
        %v1448 = vunpack.c.l.b16 %v1404
        %v1449 = vunpack.c.h.b16 %v1404
        %v1450 = vunpack.c.l.b16 %v1405
        %v1451 = vunpack.c.h.b16 %v1405
        %v1452 = vunpack.c.l.b16 %v1406
        %v1453 = vunpack.c.h.b16 %v1406
        %v1454 = vunpack.c.l.b16 %v1407
        %v1455 = vunpack.c.h.b16 %v1407
        %v1456 = vpack.c.b16 %v1426, %v1424
        %v1457 = vpack.c.b16 %v1427, %v1425
        %v1458 = vpack.c.b16 %v1430, %v1428
        %v1459 = vpack.c.b16 %v1431, %v1429
        %v1460 = vpack.c.b16 %v1434, %v1432
        %v1461 = vpack.c.b16 %v1435, %v1433
        %v1462 = vpack.c.b16 %v1438, %v1436
        %v1463 = vpack.c.b16 %v1439, %v1437
        %v1464 = vpack.c.b16 %v1442, %v1440
        %v1465 = vpack.c.b16 %v1443, %v1441
        %v1466 = vpack.c.b16 %v1446, %v1444
        %v1467 = vpack.c.b16 %v1447, %v1445
        %v1468 = vpack.c.b16 %v1450, %v1448
        %v1469 = vpack.c.b16 %v1451, %v1449
        %v1470 = vpack.c.b16 %v1454, %v1452
        %v1471 = vpack.c.b16 %v1455, %v1453
        %1488 = vmatprep.subr.bf16.mxu0 %v1457
        %1489 = vmatpush1.bf16.msra.mxu0 %v1456
        %1490 = vmatprep.subr.bf16.mxu0 %v1459
        %1491 = vmatpush1.bf16.msra.mxu0 %v1458
        %1492 = vmatprep.subr.bf16.mxu0 %v1461
        %1493 = vmatpush1.bf16.msra.mxu0 %v1460
        %1494 = vmatprep.subr.bf16.mxu0 %v1463
        %1495 = vmatpush1.bf16.msra.mxu0 %v1462
        %1496 = vmatprep.subr.bf16.mxu0 %v1465
        %1497 = vmatpush1.bf16.msra.mxu0 %v1464
        %1498 = vmatprep.subr.bf16.mxu0 %v1467
        %1499 = vmatpush1.bf16.msra.mxu0 %v1466
        %1500 = vmatprep.subr.bf16.mxu0 %v1469
        %1501 = vmatpush1.bf16.msra.mxu0 %v1468
        %1502 = vmatprep.subr.bf16.mxu0 %v1471
        %1503 = vmatpush1.bf16.msra.mxu0 %v1470
        %1504 = vmatprep.subr.bf16.mxu0 0
        %1505 = vmatpush1.bf16.msra.mxu0 0
        %1506 = vmatprep.subr.bf16.mxu0 0
        %1507 = vmatpush1.bf16.msra.mxu0 0
        %1508 = vmatprep.subr.bf16.mxu0 0
        %1509 = vmatpush1.bf16.msra.mxu0 0
        %1510 = vmatprep.subr.bf16.mxu0 0
        %1511 = vmatpush1.bf16.msra.mxu0 0
        %1512 = vmatprep.subr.bf16.mxu0 0
        %1513 = vmatpush1.bf16.msra.mxu0 0
        %1514 = vmatprep.subr.bf16.mxu0 0
        %1515 = vmatpush1.bf16.msra.mxu0 0
        %1516 = vmatprep.subr.bf16.mxu0 0
        %1517 = vmatpush1.bf16.msra.mxu0 0
        %1518 = vmatprep.subr.bf16.mxu0 0
        %1519 = vmatpush1.bf16.msra.mxu0 0
        %1520 = vmatprep.mubr.bf16.mxu0 0
        %1521 = vmatmul.mubr.bf16.gmra.mrb[0].mxu0 %v1376
        %v1522 = vpop.f32.mrb[0].mxu0
        %v1523 = vadd.f32 0.0, %v1522
        %v1524 = vpop.f32.mrb[0].mxu0
        %v1525 = vadd.f32 0.0, %v1524
        %v1526 = vpop.f32.mrb[0].mxu0
        %v1527 = vadd.f32 0.0, %v1526
        %v1528 = vpop.f32.mrb[0].mxu0
        %v1529 = vadd.f32 0.0, %v1528
        %1530 = vmatprep.mubr.bf16.mxu0 0
        %1531 = vmatmul.mubr.bf16.gmra.mrb[0].mxu0 %v1377
        %v1532 = vpop.f32.mrb[0].mxu0
        %v1533 = vadd.f32 0.0, %v1532
        %v1534 = vpop.f32.mrb[0].mxu0
        %v1535 = vadd.f32 0.0, %v1534
        %v1536 = vpop.f32.mrb[0].mxu0
        %v1537 = vadd.f32 0.0, %v1536
        %v1538 = vpop.f32.mrb[0].mxu0
        %v1539 = vadd.f32 0.0, %v1538
        %1540 = vmatprep.mubr.bf16.mxu0 0
        %1541 = vmatmul.mubr.bf16.gmra.mrb[0].mxu0 %v1378
        %v1542 = vpop.f32.mrb[0].mxu0
        %v1543 = vadd.f32 0.0, %v1542
        %v1544 = vpop.f32.mrb[0].mxu0
        %v1545 = vadd.f32 0.0, %v1544
        %v1546 = vpop.f32.mrb[0].mxu0
        %v1547 = vadd.f32 0.0, %v1546
        %v1548 = vpop.f32.mrb[0].mxu0
        %v1549 = vadd.f32 0.0, %v1548
        %1550 = vmatprep.mubr.bf16.mxu0 0
        %1551 = vmatmul.mubr.bf16.gmra.mrb[0].mxu0 %v1379
        %v1552 = vpop.f32.mrb[0].mxu0
        %v1553 = vadd.f32 0.0, %v1552
        %v1554 = vpop.f32.mrb[0].mxu0
        %v1555 = vadd.f32 0.0, %v1554
        %v1556 = vpop.f32.mrb[0].mxu0
        %v1557 = vadd.f32 0.0, %v1556
        %v1558 = vpop.f32.mrb[0].mxu0
        %v1559 = vadd.f32 0.0, %v1558
        %1560 = vmatprep.mubr.bf16.mxu0 0
        %1561 = vmatmul.mubr.bf16.gmra.mrb[0].mxu0 %v1380
        %v1562 = vpop.f32.mrb[0].mxu0
        %v1563 = vadd.f32 0.0, %v1562
        %v1564 = vpop.f32.mrb[0].mxu0
        %v1565 = vadd.f32 0.0, %v1564
        %v1566 = vpop.f32.mrb[0].mxu0
        %v1567 = vadd.f32 0.0, %v1566
        %v1568 = vpop.f32.mrb[0].mxu0
        %v1569 = vadd.f32 0.0, %v1568
        %1570 = vmatprep.mubr.bf16.mxu0 0
        %1571 = vmatmul.mubr.bf16.gmra.mrb[0].mxu0 %v1381
        %v1572 = vpop.f32.mrb[0].mxu0
        %v1573 = vadd.f32 0.0, %v1572
        %v1574 = vpop.f32.mrb[0].mxu0
        %v1575 = vadd.f32 0.0, %v1574
        %v1576 = vpop.f32.mrb[0].mxu0
        %v1577 = vadd.f32 0.0, %v1576
        %v1578 = vpop.f32.mrb[0].mxu0
        %v1579 = vadd.f32 0.0, %v1578
        %1580 = vmatprep.mubr.bf16.mxu0 0
        %1581 = vmatmul.mubr.bf16.gmra.mrb[0].mxu0 %v1382
        %v1582 = vpop.f32.mrb[0].mxu0
        %v1583 = vadd.f32 0.0, %v1582
        %v1584 = vpop.f32.mrb[0].mxu0
        %v1585 = vadd.f32 0.0, %v1584
        %v1586 = vpop.f32.mrb[0].mxu0
        %v1587 = vadd.f32 0.0, %v1586
        %v1588 = vpop.f32.mrb[0].mxu0
        %v1589 = vadd.f32 0.0, %v1588
        %1590 = vmatprep.mubr.bf16.mxu0 0
        %1591 = vmatmul.mubr.bf16.gmra.mrb[0].mxu0 %v1383
        %v1592 = vpop.f32.mrb[0].mxu0
        %v1593 = vadd.f32 0.0, %v1592
        %v1594 = vpop.f32.mrb[0].mxu0
        %v1595 = vadd.f32 0.0, %v1594
        %v1596 = vpop.f32.mrb[0].mxu0
        %v1597 = vadd.f32 0.0, %v1596
        %v1598 = vpop.f32.mrb[0].mxu0
        %v1599 = vadd.f32 0.0, %v1598
        %1600 = vmatprep.mubr.bf16.mxu0 0
        %1601 = vmatmul.mubr.bf16.gmra.mrb[0].mxu0 %v1384
        %v1602 = vpop.f32.mrb[0].mxu0
        %v1603 = vadd.f32 0.0, %v1602
        %v1604 = vpop.f32.mrb[0].mxu0
        %v1605 = vadd.f32 0.0, %v1604
        %v1606 = vpop.f32.mrb[0].mxu0
        %v1607 = vadd.f32 0.0, %v1606
        %v1608 = vpop.f32.mrb[0].mxu0
        %v1609 = vadd.f32 0.0, %v1608
        %1610 = vmatprep.mubr.bf16.mxu0 0
        %1611 = vmatmul.mubr.bf16.gmra.mrb[0].mxu0 %v1385
        %v1612 = vpop.f32.mrb[0].mxu0
        %v1613 = vadd.f32 0.0, %v1612
        %v1614 = vpop.f32.mrb[0].mxu0
        %v1615 = vadd.f32 0.0, %v1614
        %v1616 = vpop.f32.mrb[0].mxu0
        %v1617 = vadd.f32 0.0, %v1616
        %v1618 = vpop.f32.mrb[0].mxu0
        %v1619 = vadd.f32 0.0, %v1618
        %1620 = vmatprep.mubr.bf16.mxu0 0
        %1621 = vmatmul.mubr.bf16.gmra.mrb[0].mxu0 %v1386
        %v1622 = vpop.f32.mrb[0].mxu0
        %v1623 = vadd.f32 0.0, %v1622
        %v1624 = vpop.f32.mrb[0].mxu0
        %v1625 = vadd.f32 0.0, %v1624
        %v1626 = vpop.f32.mrb[0].mxu0
        %v1627 = vadd.f32 0.0, %v1626
        %v1628 = vpop.f32.mrb[0].mxu0
        %v1629 = vadd.f32 0.0, %v1628
        %1630 = vmatprep.mubr.bf16.mxu0 0
        %1631 = vmatmul.mubr.bf16.gmra.mrb[0].mxu0 %v1387
        %v1632 = vpop.f32.mrb[0].mxu0
        %v1633 = vadd.f32 0.0, %v1632
        %v1634 = vpop.f32.mrb[0].mxu0
        %v1635 = vadd.f32 0.0, %v1634
        %v1636 = vpop.f32.mrb[0].mxu0
        %v1637 = vadd.f32 0.0, %v1636
        %v1638 = vpop.f32.mrb[0].mxu0
        %v1639 = vadd.f32 0.0, %v1638
        %1640 = vmatprep.mubr.bf16.mxu0 0
        %1641 = vmatmul.mubr.bf16.gmra.mrb[0].mxu0 %v1388
        %v1642 = vpop.f32.mrb[0].mxu0
        %v1643 = vadd.f32 0.0, %v1642
        %v1644 = vpop.f32.mrb[0].mxu0
        %v1645 = vadd.f32 0.0, %v1644
        %v1646 = vpop.f32.mrb[0].mxu0
        %v1647 = vadd.f32 0.0, %v1646
        %v1648 = vpop.f32.mrb[0].mxu0
        %v1649 = vadd.f32 0.0, %v1648
        %1650 = vmatprep.mubr.bf16.mxu0 0
        %1651 = vmatmul.mubr.bf16.gmra.mrb[0].mxu0 %v1389
        %v1652 = vpop.f32.mrb[0].mxu0
        %v1653 = vadd.f32 0.0, %v1652
        %v1654 = vpop.f32.mrb[0].mxu0
        %v1655 = vadd.f32 0.0, %v1654
        %v1656 = vpop.f32.mrb[0].mxu0
        %v1657 = vadd.f32 0.0, %v1656
        %v1658 = vpop.f32.mrb[0].mxu0
        %v1659 = vadd.f32 0.0, %v1658
        %1660 = vmatprep.mubr.bf16.mxu0 0
        %1661 = vmatmul.mubr.bf16.gmra.mrb[0].mxu0 %v1390
        %v1662 = vpop.f32.mrb[0].mxu0
        %v1663 = vadd.f32 0.0, %v1662
        %v1664 = vpop.f32.mrb[0].mxu0
        %v1665 = vadd.f32 0.0, %v1664
        %v1666 = vpop.f32.mrb[0].mxu0
        %v1667 = vadd.f32 0.0, %v1666
        %v1668 = vpop.f32.mrb[0].mxu0
        %v1669 = vadd.f32 0.0, %v1668
        %1670 = vmatprep.mubr.bf16.mxu0 0
        %1671 = vmatmul.mubr.bf16.gmra.mrb[0].mxu0 %v1391
        %v1672 = vpop.f32.mrb[0].mxu0
        %v1673 = vadd.f32 0.0, %v1672
        %v1674 = vpop.f32.mrb[0].mxu0
        %v1675 = vadd.f32 0.0, %v1674
        %v1676 = vpop.f32.mrb[0].mxu0
        %v1677 = vadd.f32 0.0, %v1676
        %v1678 = vpop.f32.mrb[0].mxu0
        %v1679 = vadd.f32 0.0, %v1678
        %1680 = vdwg.mxu0
        %v1681 = vmul.f32 %v1523, %v1523
        %v1682 = vmul.f32 %v1527, %v1527
        %v1683 = vmul.f32 %v1533, %v1533
        %v1684 = vmul.f32 %v1537, %v1537
        %v1685 = vmul.f32 %v1543, %v1543
        %v1686 = vmul.f32 %v1547, %v1547
        %v1687 = vmul.f32 %v1553, %v1553
        %v1688 = vmul.f32 %v1557, %v1557
        %v1689 = vmul.f32 %v1563, %v1563
        %v1690 = vmul.f32 %v1567, %v1567
        %v1691 = vmul.f32 %v1573, %v1573
        %v1692 = vmul.f32 %v1577, %v1577
        %v1693 = vmul.f32 %v1583, %v1583
        %v1694 = vmul.f32 %v1587, %v1587
        %v1695 = vmul.f32 %v1593, %v1593
        %v1696 = vmul.f32 %v1597, %v1597
        %v1697 = vmul.f32 %v1603, %v1603
        %v1698 = vmul.f32 %v1607, %v1607
        %v1699 = vmul.f32 %v1613, %v1613
        %v1700 = vmul.f32 %v1617, %v1617
        %v1701 = vmul.f32 %v1623, %v1623
        %v1702 = vmul.f32 %v1627, %v1627
        %v1703 = vmul.f32 %v1633, %v1633
        %v1704 = vmul.f32 %v1637, %v1637
        %v1705 = vmul.f32 %v1643, %v1643
        %v1706 = vmul.f32 %v1647, %v1647
        %v1707 = vmul.f32 %v1653, %v1653
        %v1708 = vmul.f32 %v1657, %v1657
        %v1709 = vmul.f32 %v1663, %v1663
        %v1710 = vmul.f32 %v1667, %v1667
        %v1711 = vmul.f32 %v1673, %v1673
        %v1712 = vmul.f32 %v1677, %v1677
        %v1713 = vmul.f32 %v1525, %v1525
        %v1714 = vmul.f32 %v1529, %v1529
        %v1715 = vmul.f32 %v1535, %v1535
        %v1716 = vmul.f32 %v1539, %v1539
        %v1717 = vmul.f32 %v1545, %v1545
        %v1718 = vmul.f32 %v1549, %v1549
        %v1719 = vmul.f32 %v1555, %v1555
        %v1720 = vmul.f32 %v1559, %v1559
        %v1721 = vmul.f32 %v1565, %v1565
        %v1722 = vmul.f32 %v1569, %v1569
        %v1723 = vmul.f32 %v1575, %v1575
        %v1724 = vmul.f32 %v1579, %v1579
        %v1725 = vmul.f32 %v1585, %v1585
        %v1726 = vmul.f32 %v1589, %v1589
        %v1727 = vmul.f32 %v1595, %v1595
        %v1728 = vmul.f32 %v1599, %v1599
        %v1729 = vmul.f32 %v1605, %v1605
        %v1730 = vmul.f32 %v1609, %v1609
        %v1731 = vmul.f32 %v1615, %v1615
        %v1732 = vmul.f32 %v1619, %v1619
        %v1733 = vmul.f32 %v1625, %v1625
        %v1734 = vmul.f32 %v1629, %v1629
        %v1735 = vmul.f32 %v1635, %v1635
        %v1736 = vmul.f32 %v1639, %v1639
        %v1737 = vmul.f32 %v1645, %v1645
        %v1738 = vmul.f32 %v1649, %v1649
        %v1739 = vmul.f32 %v1655, %v1655
        %v1740 = vmul.f32 %v1659, %v1659
        %v1741 = vmul.f32 %v1665, %v1665
        %v1742 = vmul.f32 %v1669, %v1669
        %v1743 = vmul.f32 %v1675, %v1675
        %v1744 = vmul.f32 %v1679, %v1679
        %v1745 = vadd.f32 %v1681, %v1713
        %v1746 = vadd.f32 %v1682, %v1714
        %v1747 = vadd.f32 %v1683, %v1715
        %v1748 = vadd.f32 %v1684, %v1716
        %v1749 = vadd.f32 %v1685, %v1717
        %v1750 = vadd.f32 %v1686, %v1718
        %v1751 = vadd.f32 %v1687, %v1719
        %v1752 = vadd.f32 %v1688, %v1720
        %v1753 = vadd.f32 %v1689, %v1721
        %v1754 = vadd.f32 %v1690, %v1722
        %v1755 = vadd.f32 %v1691, %v1723
        %v1756 = vadd.f32 %v1692, %v1724
        %v1757 = vadd.f32 %v1693, %v1725
        %v1758 = vadd.f32 %v1694, %v1726
        %v1759 = vadd.f32 %v1695, %v1727
        %v1760 = vadd.f32 %v1696, %v1728
        %v1761 = vadd.f32 %v1697, %v1729
        %v1762 = vadd.f32 %v1698, %v1730
        %v1763 = vadd.f32 %v1699, %v1731
        %v1764 = vadd.f32 %v1700, %v1732
        %v1765 = vadd.f32 %v1701, %v1733
        %v1766 = vadd.f32 %v1702, %v1734
        %v1767 = vadd.f32 %v1703, %v1735
        %v1768 = vadd.f32 %v1704, %v1736
        %v1769 = vadd.f32 %v1705, %v1737
        %v1770 = vadd.f32 %v1706, %v1738
        %v1771 = vadd.f32 %v1707, %v1739
        %v1772 = vadd.f32 %v1708, %v1740
        %v1773 = vadd.f32 %v1709, %v1741
        %v1774 = vadd.f32 %v1710, %v1742
        %v1775 = vadd.f32 %v1711, %v1743
        %v1776 = vadd.f32 %v1712, %v1744
        %v1777 = vrsqrt.pop %v1745
        %v1778 = vmul.f32 %v1745, %v1777
        %vm1779 = vcmp.eq.f32.partialorder %v1745, inf
        %v1780 = vsel %vm1779, %v1745, %v1778
        %vm1781 = vcmp.eq.f32.partialorder %v1745, 0.0
        %v1782 = vand.u32 %v1745, 2147483648
        %v1783 = vsel %vm1781, %v1782, %v1780
        %v1784 = vrsqrt.pop %v1746
        %v1785 = vmul.f32 %v1746, %v1784
        %vm1786 = vcmp.eq.f32.partialorder %v1746, inf
        %v1787 = vsel %vm1786, %v1746, %v1785
        %vm1788 = vcmp.eq.f32.partialorder %v1746, 0.0
        %v1789 = vand.u32 %v1746, 2147483648
        %v1790 = vsel %vm1788, %v1789, %v1787
        %v1791 = vrsqrt.pop %v1747
        %v1792 = vmul.f32 %v1747, %v1791
        %vm1793 = vcmp.eq.f32.partialorder %v1747, inf
        %v1794 = vsel %vm1793, %v1747, %v1792
        %vm1795 = vcmp.eq.f32.partialorder %v1747, 0.0
        %v1796 = vand.u32 %v1747, 2147483648
        %v1797 = vsel %vm1795, %v1796, %v1794
        %v1798 = vrsqrt.pop %v1748
        %v1799 = vmul.f32 %v1748, %v1798
        %vm1800 = vcmp.eq.f32.partialorder %v1748, inf
        %v1801 = vsel %vm1800, %v1748, %v1799
        %vm1802 = vcmp.eq.f32.partialorder %v1748, 0.0
        %v1803 = vand.u32 %v1748, 2147483648
        %v1804 = vsel %vm1802, %v1803, %v1801
        %v1805 = vrsqrt.pop %v1749
        %v1806 = vmul.f32 %v1749, %v1805
        %vm1807 = vcmp.eq.f32.partialorder %v1749, inf
        %v1808 = vsel %vm1807, %v1749, %v1806
        %vm1809 = vcmp.eq.f32.partialorder %v1749, 0.0
        %v1810 = vand.u32 %v1749, 2147483648
        %v1811 = vsel %vm1809, %v1810, %v1808
        %v1812 = vrsqrt.pop %v1750
        %v1813 = vmul.f32 %v1750, %v1812
        %vm1814 = vcmp.eq.f32.partialorder %v1750, inf
        %v1815 = vsel %vm1814, %v1750, %v1813
        %vm1816 = vcmp.eq.f32.partialorder %v1750, 0.0
        %v1817 = vand.u32 %v1750, 2147483648
        %v1818 = vsel %vm1816, %v1817, %v1815
        %v1819 = vrsqrt.pop %v1751
        %v1820 = vmul.f32 %v1751, %v1819
        %vm1821 = vcmp.eq.f32.partialorder %v1751, inf
        %v1822 = vsel %vm1821, %v1751, %v1820
        %vm1823 = vcmp.eq.f32.partialorder %v1751, 0.0
        %v1824 = vand.u32 %v1751, 2147483648
        %v1825 = vsel %vm1823, %v1824, %v1822
        %v1826 = vrsqrt.pop %v1752
        %v1827 = vmul.f32 %v1752, %v1826
        %vm1828 = vcmp.eq.f32.partialorder %v1752, inf
        %v1829 = vsel %vm1828, %v1752, %v1827
        %vm1830 = vcmp.eq.f32.partialorder %v1752, 0.0
        %v1831 = vand.u32 %v1752, 2147483648
        %v1832 = vsel %vm1830, %v1831, %v1829
        %v1833 = vrsqrt.pop %v1753
        %v1834 = vmul.f32 %v1753, %v1833
        %vm1835 = vcmp.eq.f32.partialorder %v1753, inf
        %v1836 = vsel %vm1835, %v1753, %v1834
        %vm1837 = vcmp.eq.f32.partialorder %v1753, 0.0
        %v1838 = vand.u32 %v1753, 2147483648
        %v1839 = vsel %vm1837, %v1838, %v1836
        %v1840 = vrsqrt.pop %v1754
        %v1841 = vmul.f32 %v1754, %v1840
        %vm1842 = vcmp.eq.f32.partialorder %v1754, inf
        %v1843 = vsel %vm1842, %v1754, %v1841
        %vm1844 = vcmp.eq.f32.partialorder %v1754, 0.0
        %v1845 = vand.u32 %v1754, 2147483648
        %v1846 = vsel %vm1844, %v1845, %v1843
        %v1847 = vrsqrt.pop %v1755
        %v1848 = vmul.f32 %v1755, %v1847
        %vm1849 = vcmp.eq.f32.partialorder %v1755, inf
        %v1850 = vsel %vm1849, %v1755, %v1848
        %vm1851 = vcmp.eq.f32.partialorder %v1755, 0.0
        %v1852 = vand.u32 %v1755, 2147483648
        %v1853 = vsel %vm1851, %v1852, %v1850
        %v1854 = vrsqrt.pop %v1756
        %v1855 = vmul.f32 %v1756, %v1854
        %vm1856 = vcmp.eq.f32.partialorder %v1756, inf
        %v1857 = vsel %vm1856, %v1756, %v1855
        %vm1858 = vcmp.eq.f32.partialorder %v1756, 0.0
        %v1859 = vand.u32 %v1756, 2147483648
        %v1860 = vsel %vm1858, %v1859, %v1857
        %v1861 = vrsqrt.pop %v1757
        %v1862 = vmul.f32 %v1757, %v1861
        %vm1863 = vcmp.eq.f32.partialorder %v1757, inf
        %v1864 = vsel %vm1863, %v1757, %v1862
        %vm1865 = vcmp.eq.f32.partialorder %v1757, 0.0
        %v1866 = vand.u32 %v1757, 2147483648
        %v1867 = vsel %vm1865, %v1866, %v1864
        %v1868 = vrsqrt.pop %v1758
        %v1869 = vmul.f32 %v1758, %v1868
        %vm1870 = vcmp.eq.f32.partialorder %v1758, inf
        %v1871 = vsel %vm1870, %v1758, %v1869
        %vm1872 = vcmp.eq.f32.partialorder %v1758, 0.0
        %v1873 = vand.u32 %v1758, 2147483648
        %v1874 = vsel %vm1872, %v1873, %v1871
        %v1875 = vrsqrt.pop %v1759
        %v1876 = vmul.f32 %v1759, %v1875
        %vm1877 = vcmp.eq.f32.partialorder %v1759, inf
        %v1878 = vsel %vm1877, %v1759, %v1876
        %vm1879 = vcmp.eq.f32.partialorder %v1759, 0.0
        %v1880 = vand.u32 %v1759, 2147483648
        %v1881 = vsel %vm1879, %v1880, %v1878
        %v1882 = vrsqrt.pop %v1760
        %v1883 = vmul.f32 %v1760, %v1882
        %vm1884 = vcmp.eq.f32.partialorder %v1760, inf
        %v1885 = vsel %vm1884, %v1760, %v1883
        %vm1886 = vcmp.eq.f32.partialorder %v1760, 0.0
        %v1887 = vand.u32 %v1760, 2147483648
        %v1888 = vsel %vm1886, %v1887, %v1885
        %v1889 = vrsqrt.pop %v1761
        %v1890 = vmul.f32 %v1761, %v1889
        %vm1891 = vcmp.eq.f32.partialorder %v1761, inf
        %v1892 = vsel %vm1891, %v1761, %v1890
        %vm1893 = vcmp.eq.f32.partialorder %v1761, 0.0
        %v1894 = vand.u32 %v1761, 2147483648
        %v1895 = vsel %vm1893, %v1894, %v1892
        %v1896 = vrsqrt.pop %v1762
        %v1897 = vmul.f32 %v1762, %v1896
        %vm1898 = vcmp.eq.f32.partialorder %v1762, inf
        %v1899 = vsel %vm1898, %v1762, %v1897
        %vm1900 = vcmp.eq.f32.partialorder %v1762, 0.0
        %v1901 = vand.u32 %v1762, 2147483648
        %v1902 = vsel %vm1900, %v1901, %v1899
        %v1903 = vrsqrt.pop %v1763
        %v1904 = vmul.f32 %v1763, %v1903
        %vm1905 = vcmp.eq.f32.partialorder %v1763, inf
        %v1906 = vsel %vm1905, %v1763, %v1904
        %vm1907 = vcmp.eq.f32.partialorder %v1763, 0.0
        %v1908 = vand.u32 %v1763, 2147483648
        %v1909 = vsel %vm1907, %v1908, %v1906
        %v1910 = vrsqrt.pop %v1764
        %v1911 = vmul.f32 %v1764, %v1910
        %vm1912 = vcmp.eq.f32.partialorder %v1764, inf
        %v1913 = vsel %vm1912, %v1764, %v1911
        %vm1914 = vcmp.eq.f32.partialorder %v1764, 0.0
        %v1915 = vand.u32 %v1764, 2147483648
        %v1916 = vsel %vm1914, %v1915, %v1913
        %v1917 = vrsqrt.pop %v1765
        %v1918 = vmul.f32 %v1765, %v1917
        %vm1919 = vcmp.eq.f32.partialorder %v1765, inf
        %v1920 = vsel %vm1919, %v1765, %v1918
        %vm1921 = vcmp.eq.f32.partialorder %v1765, 0.0
        %v1922 = vand.u32 %v1765, 2147483648
        %v1923 = vsel %vm1921, %v1922, %v1920
        %v1924 = vrsqrt.pop %v1766
        %v1925 = vmul.f32 %v1766, %v1924
        %vm1926 = vcmp.eq.f32.partialorder %v1766, inf
        %v1927 = vsel %vm1926, %v1766, %v1925
        %vm1928 = vcmp.eq.f32.partialorder %v1766, 0.0
        %v1929 = vand.u32 %v1766, 2147483648
        %v1930 = vsel %vm1928, %v1929, %v1927
        %v1931 = vrsqrt.pop %v1767
        %v1932 = vmul.f32 %v1767, %v1931
        %vm1933 = vcmp.eq.f32.partialorder %v1767, inf
        %v1934 = vsel %vm1933, %v1767, %v1932
        %vm1935 = vcmp.eq.f32.partialorder %v1767, 0.0
        %v1936 = vand.u32 %v1767, 2147483648
        %v1937 = vsel %vm1935, %v1936, %v1934
        %v1938 = vrsqrt.pop %v1768
        %v1939 = vmul.f32 %v1768, %v1938
        %vm1940 = vcmp.eq.f32.partialorder %v1768, inf
        %v1941 = vsel %vm1940, %v1768, %v1939
        %vm1942 = vcmp.eq.f32.partialorder %v1768, 0.0
        %v1943 = vand.u32 %v1768, 2147483648
        %v1944 = vsel %vm1942, %v1943, %v1941
        %v1945 = vrsqrt.pop %v1769
        %v1946 = vmul.f32 %v1769, %v1945
        %vm1947 = vcmp.eq.f32.partialorder %v1769, inf
        %v1948 = vsel %vm1947, %v1769, %v1946
        %vm1949 = vcmp.eq.f32.partialorder %v1769, 0.0
        %v1950 = vand.u32 %v1769, 2147483648
        %v1951 = vsel %vm1949, %v1950, %v1948
        %v1952 = vrsqrt.pop %v1770
        %v1953 = vmul.f32 %v1770, %v1952
        %vm1954 = vcmp.eq.f32.partialorder %v1770, inf
        %v1955 = vsel %vm1954, %v1770, %v1953
        %vm1956 = vcmp.eq.f32.partialorder %v1770, 0.0
        %v1957 = vand.u32 %v1770, 2147483648
        %v1958 = vsel %vm1956, %v1957, %v1955
        %v1959 = vrsqrt.pop %v1771
        %v1960 = vmul.f32 %v1771, %v1959
        %vm1961 = vcmp.eq.f32.partialorder %v1771, inf
        %v1962 = vsel %vm1961, %v1771, %v1960
        %vm1963 = vcmp.eq.f32.partialorder %v1771, 0.0
        %v1964 = vand.u32 %v1771, 2147483648
        %v1965 = vsel %vm1963, %v1964, %v1962
        %v1966 = vrsqrt.pop %v1772
        %v1967 = vmul.f32 %v1772, %v1966
        %vm1968 = vcmp.eq.f32.partialorder %v1772, inf
        %v1969 = vsel %vm1968, %v1772, %v1967
        %vm1970 = vcmp.eq.f32.partialorder %v1772, 0.0
        %v1971 = vand.u32 %v1772, 2147483648
        %v1972 = vsel %vm1970, %v1971, %v1969
        %v1973 = vrsqrt.pop %v1773
        %v1974 = vmul.f32 %v1773, %v1973
        %vm1975 = vcmp.eq.f32.partialorder %v1773, inf
        %v1976 = vsel %vm1975, %v1773, %v1974
        %vm1977 = vcmp.eq.f32.partialorder %v1773, 0.0
        %v1978 = vand.u32 %v1773, 2147483648
        %v1979 = vsel %vm1977, %v1978, %v1976
        %v1980 = vrsqrt.pop %v1774
        %v1981 = vmul.f32 %v1774, %v1980
        %vm1982 = vcmp.eq.f32.partialorder %v1774, inf
        %v1983 = vsel %vm1982, %v1774, %v1981
        %vm1984 = vcmp.eq.f32.partialorder %v1774, 0.0
        %v1985 = vand.u32 %v1774, 2147483648
        %v1986 = vsel %vm1984, %v1985, %v1983
        %v1987 = vrsqrt.pop %v1775
        %v1988 = vmul.f32 %v1775, %v1987
        %vm1989 = vcmp.eq.f32.partialorder %v1775, inf
        %v1990 = vsel %vm1989, %v1775, %v1988
        %vm1991 = vcmp.eq.f32.partialorder %v1775, 0.0
        %v1992 = vand.u32 %v1775, 2147483648
        %v1993 = vsel %vm1991, %v1992, %v1990
        %v1994 = vrsqrt.pop %v1776
        %v1995 = vmul.f32 %v1776, %v1994
        %vm1996 = vcmp.eq.f32.partialorder %v1776, inf
        %v1997 = vsel %vm1996, %v1776, %v1995
        %vm1998 = vcmp.eq.f32.partialorder %v1776, 0.0
        %v1999 = vand.u32 %v1776, 2147483648
        %v2000 = vsel %vm1998, %v1999, %v1997
        %2001 = vst [vmem:[%s281] sm:$0xff] %v1783
        %2002 = vst [vmem:[%s281 + $0x8] sm:$0xff] %v1790
        %2003 = vst [vmem:[%s281 + $0x10] sm:$0xff] %v1797
        %2004 = vst [vmem:[%s281 + $0x18] sm:$0xff] %v1804
        %2005 = vst [vmem:[%s281 + $0x20] sm:$0xff] %v1811
        %2006 = vst [vmem:[%s281 + $0x28] sm:$0xff] %v1818
        %2007 = vst [vmem:[%s281 + $0x30] sm:$0xff] %v1825
        %2008 = vst [vmem:[%s281 + $0x38] sm:$0xff] %v1832
        %2009 = vst [vmem:[%s281 + $0x40] sm:$0xff] %v1839
        %2010 = vst [vmem:[%s281 + $0x48] sm:$0xff] %v1846
        %2011 = vst [vmem:[%s281 + $0x50] sm:$0xff] %v1853
        %2012 = vst [vmem:[%s281 + $0x58] sm:$0xff] %v1860
        %2013 = vst [vmem:[%s281 + $0x60] sm:$0xff] %v1867
        %2014 = vst [vmem:[%s281 + $0x68] sm:$0xff] %v1874
        %2015 = vst [vmem:[%s281 + $0x70] sm:$0xff] %v1881
        %2016 = vst [vmem:[%s281 + $0x78] sm:$0xff] %v1888
        %2017 = vst [vmem:[%s281 + $0x80] sm:$0xff] %v1895
        %2018 = vst [vmem:[%s281 + $0x88] sm:$0xff] %v1902
        %2019 = vst [vmem:[%s281 + $0x90] sm:$0xff] %v1909
        %2020 = vst [vmem:[%s281 + $0x98] sm:$0xff] %v1916
        %2021 = vst [vmem:[%s281 + $0xa0] sm:$0xff] %v1923
        %2022 = vst [vmem:[%s281 + $0xa8] sm:$0xff] %v1930
        %2023 = vst [vmem:[%s281 + $0xb0] sm:$0xff] %v1937
        %2024 = vst [vmem:[%s281 + $0xb8] sm:$0xff] %v1944
        %2025 = vst [vmem:[%s281 + $0xc0] sm:$0xff] %v1951
        %2026 = vst [vmem:[%s281 + $0xc8] sm:$0xff] %v1958
        %2027 = vst [vmem:[%s281 + $0xd0] sm:$0xff] %v1965
        %2028 = vst [vmem:[%s281 + $0xd8] sm:$0xff] %v1972
        %2029 = vst [vmem:[%s281 + $0xe0] sm:$0xff] %v1979
        %2030 = vst [vmem:[%s281 + $0xe8] sm:$0xff] %v1986
        %2031 = vst [vmem:[%s281 + $0xf0] sm:$0xff] %v1993
        %2032 = vst [vmem:[%s281 + $0xf8] sm:$0xff] %v2000
        %v2033 = vpack.c.bf16 %v1527, %v1523
        %v2034 = vpack.c.bf16 %v1537, %v1533
        %v2035 = vpack.c.bf16 %v1547, %v1543
        %v2036 = vpack.c.bf16 %v1557, %v1553
        %v2037 = vpack.c.bf16 %v1567, %v1563
        %v2038 = vpack.c.bf16 %v1577, %v1573
        %v2039 = vpack.c.bf16 %v1587, %v1583
        %v2040 = vpack.c.bf16 %v1597, %v1593
        %v2041 = vpack.c.bf16 %v1607, %v1603
        %v2042 = vpack.c.bf16 %v1617, %v1613
        %v2043 = vpack.c.bf16 %v1627, %v1623
        %v2044 = vpack.c.bf16 %v1637, %v1633
        %v2045 = vpack.c.bf16 %v1647, %v1643
        %v2046 = vpack.c.bf16 %v1657, %v1653
        %v2047 = vpack.c.bf16 %v1667, %v1663
        %v2048 = vpack.c.bf16 %v1677, %v1673
        %v2065 = vunpack.c.l.b16 %v2033
        %v2066 = vunpack.c.h.b16 %v2033
        %v2067 = vunpack.c.l.b16 %v2034
        %v2068 = vunpack.c.h.b16 %v2034
        %v2069 = vunpack.c.l.b16 %v2035
        %v2070 = vunpack.c.h.b16 %v2035
        %v2071 = vunpack.c.l.b16 %v2036
        %v2072 = vunpack.c.h.b16 %v2036
        %v2073 = vunpack.c.l.b16 %v2037
        %v2074 = vunpack.c.h.b16 %v2037
        %v2075 = vunpack.c.l.b16 %v2038
        %v2076 = vunpack.c.h.b16 %v2038
        %v2077 = vunpack.c.l.b16 %v2039
        %v2078 = vunpack.c.h.b16 %v2039
        %v2079 = vunpack.c.l.b16 %v2040
        %v2080 = vunpack.c.h.b16 %v2040
        %v2081 = vunpack.c.l.b16 %v2041
        %v2082 = vunpack.c.h.b16 %v2041
        %v2083 = vunpack.c.l.b16 %v2042
        %v2084 = vunpack.c.h.b16 %v2042
        %v2085 = vunpack.c.l.b16 %v2043
        %v2086 = vunpack.c.h.b16 %v2043
        %v2087 = vunpack.c.l.b16 %v2044
        %v2088 = vunpack.c.h.b16 %v2044
        %v2089 = vunpack.c.l.b16 %v2045
        %v2090 = vunpack.c.h.b16 %v2045
        %v2091 = vunpack.c.l.b16 %v2046
        %v2092 = vunpack.c.h.b16 %v2046
        %v2093 = vunpack.c.l.b16 %v2047
        %v2094 = vunpack.c.h.b16 %v2047
        %v2095 = vunpack.c.l.b16 %v2048
        %v2096 = vunpack.c.h.b16 %v2048
        %v2097 = vpack.c.b16 %v2065, %v2065
        %v2098 = vpack.c.b16 %v2066, %v2066
        %v2099 = vpack.c.b16 %v2067, %v2067
        %v2100 = vpack.c.b16 %v2068, %v2068
        %v2101 = vpack.c.b16 %v2069, %v2069
        %v2102 = vpack.c.b16 %v2070, %v2070
        %v2103 = vpack.c.b16 %v2071, %v2071
        %v2104 = vpack.c.b16 %v2072, %v2072
        %v2105 = vpack.c.b16 %v2073, %v2073
        %v2106 = vpack.c.b16 %v2074, %v2074
        %v2107 = vpack.c.b16 %v2075, %v2075
        %v2108 = vpack.c.b16 %v2076, %v2076
        %v2109 = vpack.c.b16 %v2077, %v2077
        %v2110 = vpack.c.b16 %v2078, %v2078
        %v2111 = vpack.c.b16 %v2079, %v2079
        %v2112 = vpack.c.b16 %v2080, %v2080
        %v2113 = vpack.c.b16 %v2081, %v2081
        %v2114 = vpack.c.b16 %v2082, %v2082
        %v2115 = vpack.c.b16 %v2083, %v2083
        %v2116 = vpack.c.b16 %v2084, %v2084
        %v2117 = vpack.c.b16 %v2085, %v2085
        %v2118 = vpack.c.b16 %v2086, %v2086
        %v2119 = vpack.c.b16 %v2087, %v2087
        %v2120 = vpack.c.b16 %v2088, %v2088
        %v2121 = vpack.c.b16 %v2089, %v2089
        %v2122 = vpack.c.b16 %v2090, %v2090
        %v2123 = vpack.c.b16 %v2091, %v2091
        %v2124 = vpack.c.b16 %v2092, %v2092
        %v2125 = vpack.c.b16 %v2093, %v2093
        %v2126 = vpack.c.b16 %v2094, %v2094
        %v2127 = vpack.c.b16 %v2095, %v2095
        %v2128 = vpack.c.b16 %v2096, %v2096
        %2161 = vst [vmem:[%s288] sm:$0xf] %v2097
        %2162 = vst [vmem:[%s288 + $0x4] sm:$0xf] %v2098
        %2163 = vst [vmem:[%s288 + $0x8] sm:$0xf] %v2099
        %2164 = vst [vmem:[%s288 + $0xc] sm:$0xf] %v2100
        %2165 = vst [vmem:[%s288 + $0x10] sm:$0xf] %v2101
        %2166 = vst [vmem:[%s288 + $0x14] sm:$0xf] %v2102
        %2167 = vst [vmem:[%s288 + $0x18] sm:$0xf] %v2103
        %2168 = vst [vmem:[%s288 + $0x1c] sm:$0xf] %v2104
        %2169 = vst [vmem:[%s288 + $0x20] sm:$0xf] %v2105
        %2170 = vst [vmem:[%s288 + $0x24] sm:$0xf] %v2106
        %2171 = vst [vmem:[%s288 + $0x28] sm:$0xf] %v2107
        %2172 = vst [vmem:[%s288 + $0x2c] sm:$0xf] %v2108
        %2173 = vst [vmem:[%s288 + $0x30] sm:$0xf] %v2109
        %2174 = vst [vmem:[%s288 + $0x34] sm:$0xf] %v2110
        %2175 = vst [vmem:[%s288 + $0x38] sm:$0xf] %v2111
        %2176 = vst [vmem:[%s288 + $0x3c] sm:$0xf] %v2112
        %2177 = vst [vmem:[%s288 + $0x40] sm:$0xf] %v2113
        %2178 = vst [vmem:[%s288 + $0x44] sm:$0xf] %v2114
        %2179 = vst [vmem:[%s288 + $0x48] sm:$0xf] %v2115
        %2180 = vst [vmem:[%s288 + $0x4c] sm:$0xf] %v2116
        %2181 = vst [vmem:[%s288 + $0x50] sm:$0xf] %v2117
        %2182 = vst [vmem:[%s288 + $0x54] sm:$0xf] %v2118
        %2183 = vst [vmem:[%s288 + $0x58] sm:$0xf] %v2119
        %2184 = vst [vmem:[%s288 + $0x5c] sm:$0xf] %v2120
        %2185 = vst [vmem:[%s288 + $0x60] sm:$0xf] %v2121
        %2186 = vst [vmem:[%s288 + $0x64] sm:$0xf] %v2122
        %2187 = vst [vmem:[%s288 + $0x68] sm:$0xf] %v2123
        %2188 = vst [vmem:[%s288 + $0x6c] sm:$0xf] %v2124
        %2189 = vst [vmem:[%s288 + $0x70] sm:$0xf] %v2125
        %2190 = vst [vmem:[%s288 + $0x74] sm:$0xf] %v2126
        %2191 = vst [vmem:[%s288 + $0x78] sm:$0xf] %v2127
        %2192 = vst [vmem:[%s288 + $0x7c] sm:$0xf] %v2128
        %v2193 = vpack.c.bf16 %v1529, %v1525
        %v2194 = vpack.c.bf16 %v1539, %v1535
        %v2195 = vpack.c.bf16 %v1549, %v1545
        %v2196 = vpack.c.bf16 %v1559, %v1555
        %v2197 = vpack.c.bf16 %v1569, %v1565
        %v2198 = vpack.c.bf16 %v1579, %v1575
        %v2199 = vpack.c.bf16 %v1589, %v1585
        %v2200 = vpack.c.bf16 %v1599, %v1595
        %v2201 = vpack.c.bf16 %v1609, %v1605
        %v2202 = vpack.c.bf16 %v1619, %v1615
        %v2203 = vpack.c.bf16 %v1629, %v1625
        %v2204 = vpack.c.bf16 %v1639, %v1635
        %v2205 = vpack.c.bf16 %v1649, %v1645
        %v2206 = vpack.c.bf16 %v1659, %v1655
        %v2207 = vpack.c.bf16 %v1669, %v1665
        %v2208 = vpack.c.bf16 %v1679, %v1675
        %v2225 = vunpack.c.l.b16 %v2193
        %v2226 = vunpack.c.h.b16 %v2193
        %v2227 = vunpack.c.l.b16 %v2194
        %v2228 = vunpack.c.h.b16 %v2194
        %v2229 = vunpack.c.l.b16 %v2195
        %v2230 = vunpack.c.h.b16 %v2195
        %v2231 = vunpack.c.l.b16 %v2196
        %v2232 = vunpack.c.h.b16 %v2196
        %v2233 = vunpack.c.l.b16 %v2197
        %v2234 = vunpack.c.h.b16 %v2197
        %v2235 = vunpack.c.l.b16 %v2198
        %v2236 = vunpack.c.h.b16 %v2198
        %v2237 = vunpack.c.l.b16 %v2199
        %v2238 = vunpack.c.h.b16 %v2199
        %v2239 = vunpack.c.l.b16 %v2200
        %v2240 = vunpack.c.h.b16 %v2200
        %v2241 = vunpack.c.l.b16 %v2201
        %v2242 = vunpack.c.h.b16 %v2201
        %v2243 = vunpack.c.l.b16 %v2202
        %v2244 = vunpack.c.h.b16 %v2202
        %v2245 = vunpack.c.l.b16 %v2203
        %v2246 = vunpack.c.h.b16 %v2203
        %v2247 = vunpack.c.l.b16 %v2204
        %v2248 = vunpack.c.h.b16 %v2204
        %v2249 = vunpack.c.l.b16 %v2205
        %v2250 = vunpack.c.h.b16 %v2205
        %v2251 = vunpack.c.l.b16 %v2206
        %v2252 = vunpack.c.h.b16 %v2206
        %v2253 = vunpack.c.l.b16 %v2207
        %v2254 = vunpack.c.h.b16 %v2207
        %v2255 = vunpack.c.l.b16 %v2208
        %v2256 = vunpack.c.h.b16 %v2208
        %v2257 = vpack.c.b16 %v2225, %v2225
        %v2258 = vpack.c.b16 %v2226, %v2226
        %v2259 = vpack.c.b16 %v2227, %v2227
        %v2260 = vpack.c.b16 %v2228, %v2228
        %v2261 = vpack.c.b16 %v2229, %v2229
        %v2262 = vpack.c.b16 %v2230, %v2230
        %v2263 = vpack.c.b16 %v2231, %v2231
        %v2264 = vpack.c.b16 %v2232, %v2232
        %v2265 = vpack.c.b16 %v2233, %v2233
        %v2266 = vpack.c.b16 %v2234, %v2234
        %v2267 = vpack.c.b16 %v2235, %v2235
        %v2268 = vpack.c.b16 %v2236, %v2236
        %v2269 = vpack.c.b16 %v2237, %v2237
        %v2270 = vpack.c.b16 %v2238, %v2238
        %v2271 = vpack.c.b16 %v2239, %v2239
        %v2272 = vpack.c.b16 %v2240, %v2240
        %v2273 = vpack.c.b16 %v2241, %v2241
        %v2274 = vpack.c.b16 %v2242, %v2242
        %v2275 = vpack.c.b16 %v2243, %v2243
        %v2276 = vpack.c.b16 %v2244, %v2244
        %v2277 = vpack.c.b16 %v2245, %v2245
        %v2278 = vpack.c.b16 %v2246, %v2246
        %v2279 = vpack.c.b16 %v2247, %v2247
        %v2280 = vpack.c.b16 %v2248, %v2248
        %v2281 = vpack.c.b16 %v2249, %v2249
        %v2282 = vpack.c.b16 %v2250, %v2250
        %v2283 = vpack.c.b16 %v2251, %v2251
        %v2284 = vpack.c.b16 %v2252, %v2252
        %v2285 = vpack.c.b16 %v2253, %v2253
        %v2286 = vpack.c.b16 %v2254, %v2254
        %v2287 = vpack.c.b16 %v2255, %v2255
        %v2288 = vpack.c.b16 %v2256, %v2256
        %2321 = vst [vmem:[%s295] sm:$0xf] %v2257
        %2322 = vst [vmem:[%s295 + $0x4] sm:$0xf] %v2258
        %2323 = vst [vmem:[%s295 + $0x8] sm:$0xf] %v2259
        %2324 = vst [vmem:[%s295 + $0xc] sm:$0xf] %v2260
        %2325 = vst [vmem:[%s295 + $0x10] sm:$0xf] %v2261
        %2326 = vst [vmem:[%s295 + $0x14] sm:$0xf] %v2262
        %2327 = vst [vmem:[%s295 + $0x18] sm:$0xf] %v2263
        %2328 = vst [vmem:[%s295 + $0x1c] sm:$0xf] %v2264
        %2329 = vst [vmem:[%s295 + $0x20] sm:$0xf] %v2265
        %2330 = vst [vmem:[%s295 + $0x24] sm:$0xf] %v2266
        %2331 = vst [vmem:[%s295 + $0x28] sm:$0xf] %v2267
        %2332 = vst [vmem:[%s295 + $0x2c] sm:$0xf] %v2268
        %2333 = vst [vmem:[%s295 + $0x30] sm:$0xf] %v2269
        %2334 = vst [vmem:[%s295 + $0x34] sm:$0xf] %v2270
        %2335 = vst [vmem:[%s295 + $0x38] sm:$0xf] %v2271
        %2336 = vst [vmem:[%s295 + $0x3c] sm:$0xf] %v2272
        %2337 = vst [vmem:[%s295 + $0x40] sm:$0xf] %v2273
        %2338 = vst [vmem:[%s295 + $0x44] sm:$0xf] %v2274
        %2339 = vst [vmem:[%s295 + $0x48] sm:$0xf] %v2275
        %2340 = vst [vmem:[%s295 + $0x4c] sm:$0xf] %v2276
        %2341 = vst [vmem:[%s295 + $0x50] sm:$0xf] %v2277
        %2342 = vst [vmem:[%s295 + $0x54] sm:$0xf] %v2278
        %2343 = vst [vmem:[%s295 + $0x58] sm:$0xf] %v2279
        %2344 = vst [vmem:[%s295 + $0x5c] sm:$0xf] %v2280
        %2345 = vst [vmem:[%s295 + $0x60] sm:$0xf] %v2281
        %2346 = vst [vmem:[%s295 + $0x64] sm:$0xf] %v2282
        %2347 = vst [vmem:[%s295 + $0x68] sm:$0xf] %v2283
        %2348 = vst [vmem:[%s295 + $0x6c] sm:$0xf] %v2284
        %2349 = vst [vmem:[%s295 + $0x70] sm:$0xf] %v2285
        %2350 = vst [vmem:[%s295 + $0x74] sm:$0xf] %v2286
        %2351 = vst [vmem:[%s295 + $0x78] sm:$0xf] %v2287
        %2352 = vst [vmem:[%s295 + $0x7c] sm:$0xf] %v2288
        %s2353 = sand.u32 %s124, 1
        %s2354 = scalar_lea.sflag [#allocation4], %s2353
        %s2355 = sand.u32 %s124, 1
        %s2356 = smul.addr %s2355, 256
        %s2357 = scalar_lea.vmem [#allocation3], %s2356
        %s2358 = sand.u32 %s23, 1
        %s2359 = scalar_lea.sflag [#allocation6], %s2358
        %s2360 = sand.u32 %s152, 1
        %s2361 = smul.addr %s2360, 128
        %s2362 = scalar_lea.vmem [#allocation5], %s2361
        %s2363 = sand.u32 %s23, 1
        %s2364 = scalar_lea.sflag [#allocation6], %s2363
        %s2365 = sand.u32 %s180, 1
        %s2366 = smul.addr %s2365, 128
        %s2367 = scalar_lea.vmem [#allocation7], %s2366
        // Predicated region
        $region33: #{tpu_custom_call.1} parent=31 // pred_check
          %p2368 = pneg %p134
        $region34: #{tpu_custom_call.1} parent=31 // pred_check_branch
          %2370 = sbr.rel (%p2368) target = $region36
        $region35: #{tpu_custom_call.1} parent=31 // pred_region
          %s2371 = smul.u32 32, %s28
          %s2373 = ssub.s32 4096, 4096
          %2374 = vsyncadd %s2354, %s2373
          %s2375 = smul.addr %s27, 32
          %s2376 = sadd.s32 %s2371, %s2375
          %s2377 = smul.addr %s2376, 128
          %s2378 = scalar_lea.hbm %s3, %s2377
          %s2379 = sshll.u32 %s2357, 4
          %s2380 = int_to_ptr.vmem [resolvable:$true] %s2379
          %2385 = dma.vmem_to_hbm [thread:$0]  %s2380, 4096, %s2378, %s2354, 128, 128, 8
        $region36: #{tpu_custom_call.1} parent=31 // pred_fallthru
          _
        // Predicated region
        $region37: #{tpu_custom_call.1} parent=31 // pred_check
          %p2386 = pneg %p162
        $region38: #{tpu_custom_call.1} parent=31 // pred_check_branch
          %2388 = sbr.rel (%p2386) target = $region40
        $region39: #{tpu_custom_call.1} parent=31 // pred_region
          %s2389 = smul.u32 32, %s28
          %s2391 = ssub.s32 2048, 2048
          %2392 = vsyncadd %s2359, %s2391
          %s2393 = smul.addr %s27, 32
          %s2394 = sadd.s32 %s2389, %s2393
          %s2395 = smul.addr %s2394, 64
          %s2396 = scalar_lea.hbm %s4, %s2395
          %s2397 = sshll.u32 %s2362, 4
          %s2398 = int_to_ptr.vmem [resolvable:$true] %s2397
          %2403 = dma.vmem_to_hbm [thread:$0]  %s2398, 2048, %s2396, %s2359, 64, 64, 4
        $region40: #{tpu_custom_call.1} parent=31 // pred_fallthru
          _
        // Predicated region
        $region41: #{tpu_custom_call.1} parent=31 // pred_check
          %p2404 = pneg %p190
        $region42: #{tpu_custom_call.1} parent=31 // pred_check_branch
          %2406 = sbr.rel (%p2404) target = $region44
        $region43: #{tpu_custom_call.1} parent=31 // pred_region
          %s2407 = smul.u32 32, %s28
          %s2409 = ssub.s32 2048, 2048
          %2410 = vsyncadd %s2364, %s2409
          %s2411 = smul.addr %s27, 32
          %s2412 = sadd.s32 %s2407, %s2411
          %s2413 = smul.addr %s2412, 64
          %s2414 = scalar_lea.hbm %s5, %s2413
          %s2415 = sshll.u32 %s2367, 4
          %s2416 = int_to_ptr.vmem [resolvable:$true] %s2415
          %2421 = dma.vmem_to_hbm [thread:$0]  %s2416, 2048, %s2414, %s2364, 64, 64, 4
        $region44: #{tpu_custom_call.1} parent=31 // pred_fallthru
          _
      $region32: #{tpu_custom_call.1} parent=5 // pred_fallthru
        _
      %p2422 = scmp.le.s32.totalorder 2, %s18
      // Predicated region
      $region45: #{tpu_custom_call.1} parent=5 // pred_check
        %p2423 = pneg %p2422
      $region46: #{tpu_custom_call.1} parent=5 // pred_check_branch
        %2425 = sbr.rel (%p2423) target = $region48
      $region47: #{tpu_custom_call.1} parent=5 // pred_region
        %s2426 = ssub.s32 %s18, 2
        // Predicated region
        $region49: #{tpu_custom_call.1} parent=47 // pred_check
          %p2427 = pneg %p140
        $region50: #{tpu_custom_call.1} parent=47 // pred_check_branch
          %2429 = sbr.rel (%p2427) target = $region52
        $region51: #{tpu_custom_call.1} parent=47 // pred_region
          %s2430 = sand.u32 %s125, 1
          %s2431 = scalar_lea.sflag [#allocation4], %s2430
          %s2432 = sand.u32 %s125, 1
          %s2433 = smul.addr %s2432, 256
          %s2434 = scalar_lea.vmem [#allocation3], %s2433
          %2435 = dma.done %s2431, 4096
        $region52: #{tpu_custom_call.1} parent=47 // pred_fallthru
          _
        // Predicated region
        $region53: #{tpu_custom_call.1} parent=47 // pred_check
          %p2436 = pneg %p168
        $region54: #{tpu_custom_call.1} parent=47 // pred_check_branch
          %2438 = sbr.rel (%p2436) target = $region56
        $region55: #{tpu_custom_call.1} parent=47 // pred_region
          %s2439 = sand.u32 %s24, 1
          %s2440 = scalar_lea.sflag [#allocation6], %s2439
          %s2441 = sand.u32 %s153, 1
          %s2442 = smul.addr %s2441, 128
          %s2443 = scalar_lea.vmem [#allocation5], %s2442
          %2444 = dma.done %s2440, 2048
        $region56: #{tpu_custom_call.1} parent=47 // pred_fallthru
          _
        // Predicated region
        $region57: #{tpu_custom_call.1} parent=47 // pred_check
          %p2445 = pneg %p196
        $region58: #{tpu_custom_call.1} parent=47 // pred_check_branch
          %2447 = sbr.rel (%p2445) target = $region60
        $region59: #{tpu_custom_call.1} parent=47 // pred_region
          %s2448 = sand.u32 %s24, 1
          %s2449 = scalar_lea.sflag [#allocation6], %s2448
          %s2450 = sand.u32 %s181, 1
          %s2451 = smul.addr %s2450, 128
          %s2452 = scalar_lea.vmem [#allocation7], %s2451
          %2453 = dma.done %s2449, 2048
        $region60: #{tpu_custom_call.1} parent=47 // pred_fallthru
          _
      $region48: #{tpu_custom_call.1} parent=5 // pred_fallthru
        _
    $region6: #{tpu_custom_call.1} parent=1 // loop_footer
      %s22 = sadd.s32 1, %s18
    $region7: #{tpu_custom_call.1} parent=1 // loop_footer_branch
      %17 = sbr.rel target = $region3
    $region8: #{tpu_custom_call.1} parent=1 // loop_exit
      _
    %2454 = vsyncpa [#allocation4], 1
    %s2455 = scalar_lea.sflag [#allocation4], 1
    %2456 = vsyncpa %s2455, 1
    %2457 = vsyncpa [#allocation6], 1
    %s2458 = scalar_lea.sflag [#allocation6], 1
    %2459 = vsyncpa %s2458, 1

</llo_original>
